<compile_context>
chip_gen: v5e
topology: v5e:2x2
jax: 0.10.0
libtpu: 0.0.40
codegen_flags: <defaults>
</compile_context>

<pallas_src>
import math

import jax
import jax.numpy as jnp
from jax.experimental import pallas as pl
from jax.experimental.pallas import tpu as pltpu

VMEM_SPEC = pl.BlockSpec(memory_space=pltpu.MemorySpace.VMEM)

VOCAB, HIDDEN, N_LAYERS, N_HEADS = 100, 32, 2, 2
INTERMEDIATE, MAX_POS, TYPE_VOCAB, NUM_LABELS = 64, 32, 2, 5
LABELS_PAD = 8            # pad CRF label dim 5 -> 8 (sublane friendly)
NEG = -1e9


# --------------------------- in-kernel helpers -------------------------------

def _ln(x, g, b):
    mu = jnp.mean(x, axis=-1, keepdims=True)
    d = x - mu
    var = jnp.mean(d * d, axis=-1, keepdims=True)
    return d * jax.lax.rsqrt(var + 1e-12) * g + b


def _first_argmax_onehot(vals, axis):
    """One-hot of the first (lowest-index) max along `axis` (torch tie-break)."""
    best = jnp.max(vals, axis=axis, keepdims=True)
    ids = jax.lax.broadcasted_iota(jnp.int32, vals.shape, axis)
    sentinel = vals.shape[axis]
    first = jnp.min(jnp.where(vals >= best, ids, sentinel), axis=axis,
                    keepdims=True)
    return (ids == first).astype(jnp.float32)


# --------------------------- fused encoder kernel ----------------------------

def _make_encoder_kernel(B, S, H, NH):
    DH = H // NH
    BS = B * S

    def kernel(x_ref, bias_ref, embg_ref, embb_ref,
               wqkv_ref, bqkv_ref, wo_ref, bo_ref, ln1g_ref, ln1b_ref,
               w1_ref, b1_ref, w2_ref, b2_ref, ln2g_ref, ln2b_ref,
               out_ref):
        # Layer 0 prologue: embedding LayerNorm; x2d then stays resident in
        # out_ref's VMEM block across the whole layer grid.
        @pl.when(pl.program_id(0) == 0)
        def _():
            out_ref[...] = _ln(x_ref[...], embg_ref[...], embb_ref[...])

        x = out_ref[...]                                         # [BS, H]
        bias = bias_ref[...]                                     # [B, S]

        # Fused QKV projection (attention scale pre-folded into wq / bq).
        qkv = jnp.dot(x, wqkv_ref[...],
                      preferred_element_type=jnp.float32) + bqkv_ref[...]

        heads = []
        for h in range(NH):                       # static head loop, in-VMEM slices
            q = qkv[:, h * DH:(h + 1) * DH].reshape(B, S, DH)
            k = qkv[:, H + h * DH:H + (h + 1) * DH].reshape(B, S, DH)
            v = qkv[:, 2 * H + h * DH:2 * H + (h + 1) * DH].reshape(B, S, DH)
            s = jnp.einsum('bqd,bkd->bqk', q, k,
                           preferred_element_type=jnp.float32)
            s = s + bias[:, None, :]                             # padding mask
            s = s - jnp.max(s, axis=-1, keepdims=True)
            p = jnp.exp(s)
            p = p * pl.reciprocal(jnp.sum(p, axis=-1, keepdims=True),
                                  approx=True)
            ctx = jnp.einsum('bqk,bkd->bqd', p, v,
                             preferred_element_type=jnp.float32)
            heads.append(ctx.reshape(BS, DH))
        ctx2d = jnp.concatenate(heads, axis=-1)                  # [BS, H]

        attn_out = jnp.dot(ctx2d, wo_ref[...],
                           preferred_element_type=jnp.float32) + bo_ref[...]
        x = _ln(x + attn_out, ln1g_ref[...], ln1b_ref[...])

        # TODO(synk): HF-BERT default is exact (erf) GELU; tanh approx used here.
        hmid = jax.nn.gelu(
            jnp.dot(x, w1_ref[...], preferred_element_type=jnp.float32)
            + b1_ref[...], approximate=True)
        ffn = jnp.dot(hmid, w2_ref[...],
                      preferred_element_type=jnp.float32) + b2_ref[...]
        out_ref[...] = _ln(x + ffn, ln2g_ref[...], ln2b_ref[...])

    return kernel


def encoder_forward(x_emb2d, bias, emb_g, emb_b, stacked, *, B, S, H, NH,
                    n_layers, inter):
    BS = B * S
    const2 = lambda l: (0, 0)
    perlyr = lambda l: (l, 0, 0)
    in_specs = [
        pl.BlockSpec((BS, H), const2),                   # x (embeddings)
        pl.BlockSpec((B, S), const2),                    # additive mask bias
        pl.BlockSpec((1, H), const2),                    # emb LN gamma
        pl.BlockSpec((1, H), const2),                    # emb LN beta
        pl.BlockSpec((None, H, 3 * H), perlyr),          # wqkv
        pl.BlockSpec((None, 1, 3 * H), perlyr),          # bqkv
        pl.BlockSpec((None, H, H), perlyr),              # wo
        pl.BlockSpec((None, 1, H), perlyr),              # bo
        pl.BlockSpec((None, 1, H), perlyr),              # ln1 gamma
        pl.BlockSpec((None, 1, H), perlyr),              # ln1 beta
        pl.BlockSpec((None, H, inter), perlyr),          # w1
        pl.BlockSpec((None, 1, inter), perlyr),          # b1
        pl.BlockSpec((None, inter, H), perlyr),          # w2
        pl.BlockSpec((None, 1, H), perlyr),              # b2
        pl.BlockSpec((None, 1, H), perlyr),              # ln2 gamma
        pl.BlockSpec((None, 1, H), perlyr),              # ln2 beta
    ]
    return pl.pallas_call(
        _make_encoder_kernel(B, S, H, NH),
        out_shape=jax.ShapeDtypeStruct((BS, H), jnp.float32),
        grid_spec=pltpu.PrefetchScalarGridSpec(
            num_scalar_prefetch=0,
            grid=(n_layers,),
            in_specs=in_specs,
            out_specs=pl.BlockSpec((BS, H), const2)),    # resident accumulator
        compiler_params=pltpu.CompilerParams(
            dimension_semantics=("arbitrary",)),
    )(x_emb2d, bias, emb_g, emb_b, *stacked)


# ---------------- fused classifier + CRF (Viterbi decode) kernel -------------

def _make_cls_crf_kernel(B, S, LP):
    T = S - 1   # CRF runs on tokens after [CLS]

    def kernel(x_ref, wc_ref, bc_ref, trans_ref, start_ref, end_ref, mask_ref,
               tags_ref):
        # Classifier (labels padded to LP; pad emissions = NEG so never chosen).
        logits = jnp.dot(x_ref[...], wc_ref[...],
                         preferred_element_type=jnp.float32) + bc_ref[...]
        logits3 = logits.reshape(B, S, LP)
        maskf = mask_ref[...]                                    # [B, S]
        trans = trans_ref[...]                                   # [LP, LP]

        # --- Viterbi forward recursion (statically unrolled, T small) ---
        score = start_ref[...] + logits3[:, 1, :]                # [B, LP]
        hist_oh = []                                             # [B, prev_i, cur_j]
        for t in range(1, T):
            em_t = logits3[:, t + 1, :]                          # [B, LP]
            ns = score[:, :, None] + trans[None, :, :] + em_t[:, None, :]
            best = jnp.max(ns, axis=1)                           # [B, j]
            hist_oh.append(_first_argmax_onehot(ns, axis=1))     # [B, i, j]
            valid = maskf[:, t + 1:t + 2] > 0.5                  # [B, 1]
            score = jnp.where(valid, best, score)
        score = score + end_ref[...]

        # --- backtracking with one-hot tag carry (all in-kernel) ---
        last_oh = _first_argmax_onehot(score, axis=1)            # [B, LP]
        iota_f = jax.lax.broadcasted_iota(jnp.int32, (B, LP), 1).astype(
            jnp.float32)

        def oh_to_idx(oh):                                       # [B, LP] -> [B, 1]
            return jnp.sum(oh * iota_f, axis=1, keepdims=True)

        tags = [None] * T
        tags[T - 1] = oh_to_idx(last_oh)
        cur = last_oh
        for s in range(T - 2, -1, -1):
            # ptr[b, i] = sum_j cur[b, j] * hist_oh[s][b, i, j]
            ptr = jnp.sum(cur[:, None, :] * hist_oh[s], axis=2)  # [B, i]
            beyond = maskf[:, s + 2:s + 3] <= 0.5                # past seq end
            cur = jnp.where(beyond, last_oh, ptr)
            tags[s] = oh_to_idx(cur)
        tags_ref[...] = jnp.concatenate(tags, axis=1).astype(jnp.int32)

    return kernel


def classifier_crf_decode(x2d, w_cls, b_cls, trans, start, end, maskf, *, B, S):
    T = S - 1
    return pl.pallas_call(
        _make_cls_crf_kernel(B, S, LABELS_PAD),
        out_shape=jax.ShapeDtypeStruct((B, T), jnp.int32),
        in_specs=[VMEM_SPEC] * 7,
        out_specs=VMEM_SPEC,
    )(x2d, w_cls, b_cls, trans, start, end, maskf)


# ------------------------------ model glue -----------------------------------

def init_params(key):
    keys = iter(jax.random.split(key, 64))

    def dense(fi, fo):
        w = 0.02 * jax.random.normal(next(keys), (fi, fo), jnp.float32)
        return w, jnp.zeros((fo,), jnp.float32)

    p = {'num_heads': N_HEADS}
    p['word_emb'] = 0.02 * jax.random.normal(next(keys), (VOCAB, HIDDEN), jnp.float32)
    p['pos_emb'] = 0.02 * jax.random.normal(next(keys), (MAX_POS, HIDDEN), jnp.float32)
    p['type_emb'] = 0.02 * jax.random.normal(next(keys), (TYPE_VOCAB, HIDDEN), jnp.float32)
    p['emb_ln_g'] = jnp.ones((HIDDEN,), jnp.float32)
    p['emb_ln_b'] = jnp.zeros((HIDDEN,), jnp.float32)
    p['layers'] = []
    for _ in range(N_LAYERS):
        l = {}
        l['wq'], l['bq'] = dense(HIDDEN, HIDDEN)
        l['wk'], l['bk'] = dense(HIDDEN, HIDDEN)
        l['wv'], l['bv'] = dense(HIDDEN, HIDDEN)
        l['wo'], l['bo'] = dense(HIDDEN, HIDDEN)
        l['ln1_g'] = jnp.ones((HIDDEN,), jnp.float32)
        l['ln1_b'] = jnp.zeros((HIDDEN,), jnp.float32)
        l['w1'], l['b1'] = dense(HIDDEN, INTERMEDIATE)
        l['w2'], l['b2'] = dense(INTERMEDIATE, HIDDEN)
        l['ln2_g'] = jnp.ones((HIDDEN,), jnp.float32)
        l['ln2_b'] = jnp.zeros((HIDDEN,), jnp.float32)
        p['layers'].append(l)
    p['w_cls'], p['b_cls'] = dense(HIDDEN, NUM_LABELS)
    p['crf_trans'] = jax.random.uniform(next(keys), (NUM_LABELS, NUM_LABELS),
                                        jnp.float32, -0.1, 0.1)
    p['crf_start'] = jax.random.uniform(next(keys), (NUM_LABELS,),
                                        jnp.float32, -0.1, 0.1)
    p['crf_end'] = jax.random.uniform(next(keys), (NUM_LABELS,),
                                      jnp.float32, -0.1, 0.1)
    return p


def ner_forward(params, input_ids):
    B, S = input_ids.shape
    H = HIDDEN
    nh = params['num_heads']
    dh = H // nh
    scale = 1.0 / math.sqrt(dh)

    attn_mask = (input_ids != 0).astype(jnp.float32)             # [B, S]
    bias = (1.0 - attn_mask) * NEG                               # additive mask

    # --- BERT embeddings (lookup glue) ---
    x = (params['word_emb'][input_ids]
         + params['pos_emb'][jnp.arange(S)][None, :, :]
         + params['type_emb'][0][None, None, :])
    x2d = x.reshape(B * S, H)

    # --- stack per-layer weights; pack QKV and fold the 1/sqrt(dh) scale ---
    lyrs = params['layers']
    wqkv = jnp.stack([jnp.concatenate([l['wq'] * scale, l['wk'], l['wv']],
                                      axis=1) for l in lyrs])
    bqkv = jnp.stack([jnp.concatenate([l['bq'] * scale, l['bk'], l['bv']]
                                      )[None, :] for l in lyrs])
    stacked = (
        wqkv, bqkv,
        jnp.stack([l['wo'] for l in lyrs]),
        jnp.stack([l['bo'][None, :] for l in lyrs]),
        jnp.stack([l['ln1_g'][None, :] for l in lyrs]),
        jnp.stack([l['ln1_b'][None, :] for l in lyrs]),
        jnp.stack([l['w1'] for l in lyrs]),
        jnp.stack([l['b1'][None, :] for l in lyrs]),
        jnp.stack([l['w2'] for l in lyrs]),
        jnp.stack([l['b2'][None, :] for l in lyrs]),
        jnp.stack([l['ln2_g'][None, :] for l in lyrs]),
        jnp.stack([l['ln2_b'][None, :] for l in lyrs]),
    )

    # --- fused BERT encoder (single pallas_call, grid over layers) ---
    x_enc = encoder_forward(x2d, bias,
                            params['emb_ln_g'].reshape(1, H),
                            params['emb_ln_b'].reshape(1, H),
                            stacked, B=B, S=S, H=H, NH=nh,
                            n_layers=len(lyrs), inter=INTERMEDIATE)

    # --- pad classifier / CRF params to LABELS_PAD (pad labels never win) ---
    L, LP = NUM_LABELS, LABELS_PAD
    w_cls_p = jnp.zeros((H, LP), jnp.float32).at[:, :L].set(params['w_cls'])
    b_cls_p = jnp.full((1, LP), NEG, jnp.float32).at[0, :L].set(params['b_cls'])
    trans_p = jnp.full((LP, LP), NEG, jnp.float32).at[:L, :L].set(params['crf_trans'])
    start_p = jnp.full((1, LP), NEG, jnp.float32).at[0, :L].set(params['crf_start'])
    end_p = jnp.full((1, LP), NEG, jnp.float32).at[0, :L].set(params['crf_end'])

    # --- fused classifier + CRF Viterbi decode (incl. backtracking) ---
    # Precondition (as in torchcrf): every sequence has >=1 valid token after [CLS].
    predict = classifier_crf_decode(x_enc, w_cls_p, b_cls_p, trans_p,
                                    start_p, end_p, attn_mask, B=B, S=S)
    crf_masks = attn_mask[:, 1:]
    return predict, crf_masks


if __name__ == "__main__":
    params = init_params(jax.random.PRNGKey(0))
    B, S = 2, 8
    input_ids = jax.random.randint(jax.random.PRNGKey(1), (B, S), 1, VOCAB,
                                   dtype=jnp.int32)
    input_ids = input_ids.at[1, 6:].set(0)   # pad tail of second sequence
    predict, crf_masks = ner_forward(params, input_ids)
    jax.block_until_ready(predict)
    print("KERNEL_OK")
</pallas_src>

<mosaic_0001>
module attributes {stable_mosaic.version = 11 : i64} {
  func.func @kernel(%arg0: i32, %arg1: memref<16x32xf32, #tpu.memory_space<vmem>>, %arg2: memref<2x8xf32, #tpu.memory_space<vmem>>, %arg3: memref<1x32xf32, #tpu.memory_space<vmem>>, %arg4: memref<1x32xf32, #tpu.memory_space<vmem>>, %arg5: memref<1x32x96xf32, #tpu.memory_space<vmem>>, %arg6: memref<1x1x96xf32, #tpu.memory_space<vmem>>, %arg7: memref<1x32x32xf32, #tpu.memory_space<vmem>>, %arg8: memref<1x1x32xf32, #tpu.memory_space<vmem>>, %arg9: memref<1x1x32xf32, #tpu.memory_space<vmem>>, %arg10: memref<1x1x32xf32, #tpu.memory_space<vmem>>, %arg11: memref<1x32x64xf32, #tpu.memory_space<vmem>>, %arg12: memref<1x1x64xf32, #tpu.memory_space<vmem>>, %arg13: memref<1x64x32xf32, #tpu.memory_space<vmem>>, %arg14: memref<1x1x32xf32, #tpu.memory_space<vmem>>, %arg15: memref<1x1x32xf32, #tpu.memory_space<vmem>>, %arg16: memref<1x1x32xf32, #tpu.memory_space<vmem>>, %arg17: memref<16x32xf32, #tpu.memory_space<vmem>>) attributes {dimension_semantics = [#tpu.dimension_semantics<arbitrary>], iteration_bounds = array<i64: 2>, scalar_prefetch = 0 : i64, scratch_operands = 0 : i64, tpu.core_type = #tpu.core_type<tc>, window_params = [{pipeline_mode = #tpu.pipeline_mode<synchronous>, transform_indices = @transform_0, window_bounds = array<i64: 16, 32>}, {pipeline_mode = #tpu.pipeline_mode<synchronous>, transform_indices = @transform_1, window_bounds = array<i64: 2, 8>}, {pipeline_mode = #tpu.pipeline_mode<synchronous>, transform_indices = @transform_2, window_bounds = array<i64: 1, 32>}, {pipeline_mode = #tpu.pipeline_mode<synchronous>, transform_indices = @transform_3, window_bounds = array<i64: 1, 32>}, {transform_indices = @transform_4, window_bounds = array<i64: 1, 32, 96>}, {transform_indices = @transform_5, window_bounds = array<i64: 1, 1, 96>}, {transform_indices = @transform_6, window_bounds = array<i64: 1, 32, 32>}, {transform_indices = @transform_7, window_bounds = array<i64: 1, 1, 32>}, {transform_indices = @transform_8, window_bounds = array<i64: 1, 1, 32>}, {transform_indices = @transform_9, window_bounds = array<i64: 1, 1, 32>}, {transform_indices = @transform_10, window_bounds = array<i64: 1, 32, 64>}, {transform_indices = @transform_11, window_bounds = array<i64: 1, 1, 64>}, {transform_indices = @transform_12, window_bounds = array<i64: 1, 64, 32>}, {transform_indices = @transform_13, window_bounds = array<i64: 1, 1, 32>}, {transform_indices = @transform_14, window_bounds = array<i64: 1, 1, 32>}, {transform_indices = @transform_15, window_bounds = array<i64: 1, 1, 32>}, {pipeline_mode = #tpu.pipeline_mode<synchronous>, transform_indices = @transform_16, window_bounds = array<i64: 16, 32>}]} {
    %c0_i32 = arith.constant 0 : i32
    %0 = arith.cmpi eq, %arg0, %c0_i32 : i32
    %1 = arith.extui %0 : i1 to i32
    %c0_i32_0 = arith.constant 0 : i32
    %2 = arith.cmpi ne, %1, %c0_i32_0 : i32
    scf.if %2 {
      %c0_67 = arith.constant 0 : index
      %c0_68 = arith.constant 0 : index
      %142 = vector.load %arg1[%c0_67, %c0_68] : memref<16x32xf32, #tpu.memory_space<vmem>>, vector<16x32xf32>
      %c0_69 = arith.constant 0 : index
      %c0_70 = arith.constant 0 : index
      %143 = vector.load %arg3[%c0_69, %c0_70] : memref<1x32xf32, #tpu.memory_space<vmem>>, vector<1x32xf32>
      %c0_71 = arith.constant 0 : index
      %c0_72 = arith.constant 0 : index
      %144 = vector.load %arg4[%c0_71, %c0_72] : memref<1x32xf32, #tpu.memory_space<vmem>>, vector<1x32xf32>
      %cst_73 = arith.constant dense<0.000000e+00> : vector<16xf32>
      %145 = vector.multi_reduction <add>, %142, %cst_73 [1] : vector<16x32xf32> to vector<16xf32>
      %146 = vector.shape_cast %145 : vector<16xf32> to vector<16x1xf32>
      %cst_74 = arith.constant 3.200000e+01 : f32
      %147 = vector.broadcast %cst_74 : f32 to vector<16x1xf32>
      %148 = arith.divf %146, %147 : vector<16x1xf32>
      %149 = vector.broadcast %148 : vector<16x1xf32> to vector<16x32xf32>
      %150 = arith.subf %142, %149 : vector<16x32xf32>
      %151 = arith.mulf %150, %150 : vector<16x32xf32>
      %cst_75 = arith.constant dense<0.000000e+00> : vector<16xf32>
      %152 = vector.multi_reduction <add>, %151, %cst_75 [1] : vector<16x32xf32> to vector<16xf32>
      %153 = vector.shape_cast %152 : vector<16xf32> to vector<16x1xf32>
      %cst_76 = arith.constant 3.200000e+01 : f32
      %154 = vector.broadcast %cst_76 : f32 to vector<16x1xf32>
      %155 = arith.divf %153, %154 : vector<16x1xf32>
      %cst_77 = arith.constant 9.99999996E-13 : f32
      %156 = vector.broadcast %cst_77 : f32 to vector<16x1xf32>
      %157 = arith.addf %155, %156 : vector<16x1xf32>
      %158 = math.rsqrt %157 : vector<16x1xf32>
      %159 = vector.broadcast %158 : vector<16x1xf32> to vector<16x32xf32>
      %160 = arith.mulf %150, %159 : vector<16x32xf32>
      %161 = vector.broadcast %143 : vector<1x32xf32> to vector<16x32xf32>
      %162 = arith.mulf %160, %161 : vector<16x32xf32>
      %163 = vector.broadcast %144 : vector<1x32xf32> to vector<16x32xf32>
      %164 = arith.addf %162, %163 : vector<16x32xf32>
      %c0_78 = arith.constant 0 : index
      %c0_79 = arith.constant 0 : index
      %165 = vector.load %arg17[%c0_78, %c0_79] : memref<16x32xf32, #tpu.memory_space<vmem>>, vector<16x32xf32>
      tpu.vector_store %arg17[%c0_78, %c0_79], %164 {strides = array<i32>} : memref<16x32xf32, #tpu.memory_space<vmem>>, vector<16x32xf32>,
    } else {
    }
    %c0 = arith.constant 0 : index
    %c0_1 = arith.constant 0 : index
    %3 = vector.load %arg17[%c0, %c0_1] : memref<16x32xf32, #tpu.memory_space<vmem>>, vector<16x32xf32>
    %c0_2 = arith.constant 0 : index
    %c0_3 = arith.constant 0 : index
    %4 = vector.load %arg2[%c0_2, %c0_3] : memref<2x8xf32, #tpu.memory_space<vmem>>, vector<2x8xf32>
    %c0_4 = arith.constant 0 : index
    %c0_5 = arith.constant 0 : index
    %c0_6 = arith.constant 0 : index
    %5 = vector.load %arg5[%c0_4, %c0_5, %c0_6] : memref<1x32x96xf32, #tpu.memory_space<vmem>>, vector<1x32x96xf32>
    %6 = vector.shape_cast %5 : vector<1x32x96xf32> to vector<32x96xf32>
    %cst = arith.constant dense<0.000000e+00> : vector<16x96xf32>
    %7 = tpu.matmul %3, %6, %cst {dimension_numbers = #tpu.dot_dimension_numbers<[1], [0], [0], [1], [0, 0, 1, 1], [], []>} : vector<16x32xf32>, vector<32x96xf32>, vector<16x96xf32> -> vector<16x96xf32>
    %c0_7 = arith.constant 0 : index
    %c0_8 = arith.constant 0 : index
    %c0_9 = arith.constant 0 : index
    %8 = vector.load %arg6[%c0_7, %c0_8, %c0_9] : memref<1x1x96xf32, #tpu.memory_space<vmem>>, vector<1x1x96xf32>
    %9 = vector.shape_cast %8 : vector<1x1x96xf32> to vector<1x96xf32>
    %10 = vector.broadcast %9 : vector<1x96xf32> to vector<16x96xf32>
    %11 = arith.addf %7, %10 : vector<16x96xf32>
    %12 = vector.extract_strided_slice %11 {offsets = [0, 0], sizes = [16, 16], strides = [1, 1]} : vector<16x96xf32> to vector<16x16xf32>
    %13 = vector.shape_cast %12 : vector<16x16xf32> to vector<2x8x16xf32>
    %14 = vector.extract_strided_slice %11 {offsets = [0, 32], sizes = [16, 16], strides = [1, 1]} : vector<16x96xf32> to vector<16x16xf32>
    %15 = vector.shape_cast %14 : vector<16x16xf32> to vector<2x8x16xf32>
    %16 = vector.extract_strided_slice %11 {offsets = [0, 64], sizes = [16, 16], strides = [1, 1]} : vector<16x96xf32> to vector<16x16xf32>
    %17 = vector.shape_cast %16 : vector<16x16xf32> to vector<2x8x16xf32>
    "tpu.trace_start"() <{level = 10 : i32, message = "bqd,bkd->bqk"}> : () -> ()
    %cst_10 = arith.constant dense<0.000000e+00> : vector<2x8x8xf32>
    %18 = tpu.matmul %13, %15, %cst_10 {dimension_numbers = #tpu.dot_dimension_numbers<[2], [2], [1], [1], [0, 0, 0, 1, 1, 1], [0], [0]>} : vector<2x8x16xf32>, vector<2x8x16xf32>, vector<2x8x8xf32> -> vector<2x8x8xf32>
    "tpu.trace_stop"() : () -> ()
    %19 = vector.shape_cast %4 : vector<2x8xf32> to vector<2x1x8xf32>
    %20 = vector.broadcast %19 : vector<2x1x8xf32> to vector<2x8x8xf32>
    %21 = arith.addf %18, %20 : vector<2x8x8xf32>
    %cst_11 = arith.constant dense<0xFF800000> : vector<2x8xf32>
    %22 = vector.multi_reduction <maximumf>, %21, %cst_11 [2] : vector<2x8x8xf32> to vector<2x8xf32>
    %23 = vector.shape_cast %22 : vector<2x8xf32> to vector<2x8x1xf32>
    %24 = vector.broadcast %23 : vector<2x8x1xf32> to vector<2x8x8xf32>
    %25 = arith.subf %21, %24 : vector<2x8x8xf32>
    %26 = math.exp %25 : vector<2x8x8xf32>
    %cst_12 = arith.constant dense<0.000000e+00> : vector<2x8xf32>
    %27 = vector.multi_reduction <add>, %26, %cst_12 [2] : vector<2x8x8xf32> to vector<2x8xf32>
    %28 = vector.shape_cast %27 : vector<2x8xf32> to vector<2x8x1xf32>
    %29 = tpu.reciprocal %28 {approx = true} : vector<2x8x1xf32> -> vector<2x8x1xf32>
    %30 = vector.broadcast %29 : vector<2x8x1xf32> to vector<2x8x8xf32>
    %31 = arith.mulf %26, %30 : vector<2x8x8xf32>
    "tpu.trace_start"() <{level = 10 : i32, message = "bqk,bkd->bqd"}> : () -> ()
    %cst_13 = arith.constant dense<0.000000e+00> : vector<2x8x16xf32>
    %32 = tpu.matmul %31, %17, %cst_13 {dimension_numbers = #tpu.dot_dimension_numbers<[2], [1], [1], [2], [0, 0, 0, 1, 1, 2], [0], [0]>} : vector<2x8x8xf32>, vector<2x8x16xf32>, vector<2x8x16xf32> -> vector<2x8x16xf32>
    "tpu.trace_stop"() : () -> ()
    %33 = vector.shape_cast %32 : vector<2x8x16xf32> to vector<16x16xf32>
    %34 = vector.extract_strided_slice %11 {offsets = [0, 16], sizes = [16, 16], strides = [1, 1]} : vector<16x96xf32> to vector<16x16xf32>
    %35 = vector.shape_cast %34 : vector<16x16xf32> to vector<2x8x16xf32>
    %36 = vector.extract_strided_slice %11 {offsets = [0, 48], sizes = [16, 16], strides = [1, 1]} : vector<16x96xf32> to vector<16x16xf32>
    %37 = vector.shape_cast %36 : vector<16x16xf32> to vector<2x8x16xf32>
    %38 = vector.extract_strided_slice %11 {offsets = [0, 80], sizes = [16, 16], strides = [1, 1]} : vector<16x96xf32> to vector<16x16xf32>
    %39 = vector.shape_cast %38 : vector<16x16xf32> to vector<2x8x16xf32>
    "tpu.trace_start"() <{level = 10 : i32, message = "bqd,bkd->bqk"}> : () -> ()
    %cst_14 = arith.constant dense<0.000000e+00> : vector<2x8x8xf32>
    %40 = tpu.matmul %35, %37, %cst_14 {dimension_numbers = #tpu.dot_dimension_numbers<[2], [2], [1], [1], [0, 0, 0, 1, 1, 1], [0], [0]>} : vector<2x8x16xf32>, vector<2x8x16xf32>, vector<2x8x8xf32> -> vector<2x8x8xf32>
    "tpu.trace_stop"() : () -> ()
    %41 = vector.shape_cast %4 : vector<2x8xf32> to vector<2x1x8xf32>
    %42 = vector.broadcast %41 : vector<2x1x8xf32> to vector<2x8x8xf32>
    %43 = arith.addf %40, %42 : vector<2x8x8xf32>
    %cst_15 = arith.constant dense<0xFF800000> : vector<2x8xf32>
    %44 = vector.multi_reduction <maximumf>, %43, %cst_15 [2] : vector<2x8x8xf32> to vector<2x8xf32>
    %45 = vector.shape_cast %44 : vector<2x8xf32> to vector<2x8x1xf32>
    %46 = vector.broadcast %45 : vector<2x8x1xf32> to vector<2x8x8xf32>
    %47 = arith.subf %43, %46 : vector<2x8x8xf32>
    %48 = math.exp %47 : vector<2x8x8xf32>
    %cst_16 = arith.constant dense<0.000000e+00> : vector<2x8xf32>
    %49 = vector.multi_reduction <add>, %48, %cst_16 [2] : vector<2x8x8xf32> to vector<2x8xf32>
    %50 = vector.shape_cast %49 : vector<2x8xf32> to vector<2x8x1xf32>
    %51 = tpu.reciprocal %50 {approx = true} : vector<2x8x1xf32> -> vector<2x8x1xf32>
    %52 = vector.broadcast %51 : vector<2x8x1xf32> to vector<2x8x8xf32>
    %53 = arith.mulf %48, %52 : vector<2x8x8xf32>
    "tpu.trace_start"() <{level = 10 : i32, message = "bqk,bkd->bqd"}> : () -> ()
    %cst_17 = arith.constant dense<0.000000e+00> : vector<2x8x16xf32>
    %54 = tpu.matmul %53, %39, %cst_17 {dimension_numbers = #tpu.dot_dimension_numbers<[2], [1], [1], [2], [0, 0, 0, 1, 1, 2], [0], [0]>} : vector<2x8x8xf32>, vector<2x8x16xf32>, vector<2x8x16xf32> -> vector<2x8x16xf32>
    "tpu.trace_stop"() : () -> ()
    %55 = vector.shape_cast %54 : vector<2x8x16xf32> to vector<16x16xf32>
    %56 = tpu.concatenate %33, %55 in 1 : vector<16x16xf32>, vector<16x16xf32> -> vector<16x32xf32>
    %c0_18 = arith.constant 0 : index
    %c0_19 = arith.constant 0 : index
    %c0_20 = arith.constant 0 : index
    %57 = vector.load %arg7[%c0_18, %c0_19, %c0_20] : memref<1x32x32xf32, #tpu.memory_space<vmem>>, vector<1x32x32xf32>
    %58 = vector.shape_cast %57 : vector<1x32x32xf32> to vector<32x32xf32>
    %cst_21 = arith.constant dense<0.000000e+00> : vector<16x32xf32>
    %59 = tpu.matmul %56, %58, %cst_21 {dimension_numbers = #tpu.dot_dimension_numbers<[1], [0], [0], [1], [0, 0, 1, 1], [], []>} : vector<16x32xf32>, vector<32x32xf32>, vector<16x32xf32> -> vector<16x32xf32>
    %c0_22 = arith.constant 0 : index
    %c0_23 = arith.constant 0 : index
    %c0_24 = arith.constant 0 : index
    %60 = vector.load %arg8[%c0_22, %c0_23, %c0_24] : memref<1x1x32xf32, #tpu.memory_space<vmem>>, vector<1x1x32xf32>
    %61 = vector.shape_cast %60 : vector<1x1x32xf32> to vector<1x32xf32>
    %62 = vector.broadcast %61 : vector<1x32xf32> to vector<16x32xf32>
    %63 = arith.addf %59, %62 : vector<16x32xf32>
    %64 = arith.addf %3, %63 : vector<16x32xf32>
    %c0_25 = arith.constant 0 : index
    %c0_26 = arith.constant 0 : index
    %c0_27 = arith.constant 0 : index
    %65 = vector.load %arg9[%c0_25, %c0_26, %c0_27] : memref<1x1x32xf32, #tpu.memory_space<vmem>>, vector<1x1x32xf32>
    %66 = vector.shape_cast %65 : vector<1x1x32xf32> to vector<1x32xf32>
    %c0_28 = arith.constant 0 : index
    %c0_29 = arith.constant 0 : index
    %c0_30 = arith.constant 0 : index
    %67 = vector.load %arg10[%c0_28, %c0_29, %c0_30] : memref<1x1x32xf32, #tpu.memory_space<vmem>>, vector<1x1x32xf32>
    %68 = vector.shape_cast %67 : vector<1x1x32xf32> to vector<1x32xf32>
    %cst_31 = arith.constant dense<0.000000e+00> : vector<16xf32>
    %69 = vector.multi_reduction <add>, %64, %cst_31 [1] : vector<16x32xf32> to vector<16xf32>
    %70 = vector.shape_cast %69 : vector<16xf32> to vector<16x1xf32>
    %cst_32 = arith.constant 3.200000e+01 : f32
    %71 = vector.broadcast %cst_32 : f32 to vector<16x1xf32>
    %72 = arith.divf %70, %71 : vector<16x1xf32>
    %73 = vector.broadcast %72 : vector<16x1xf32> to vector<16x32xf32>
    %74 = arith.subf %64, %73 : vector<16x32xf32>
    %75 = arith.mulf %74, %74 : vector<16x32xf32>
    %cst_33 = arith.constant dense<0.000000e+00> : vector<16xf32>
    %76 = vector.multi_reduction <add>, %75, %cst_33 [1] : vector<16x32xf32> to vector<16xf32>
    %77 = vector.shape_cast %76 : vector<16xf32> to vector<16x1xf32>
    %cst_34 = arith.constant 3.200000e+01 : f32
    %78 = vector.broadcast %cst_34 : f32 to vector<16x1xf32>
    %79 = arith.divf %77, %78 : vector<16x1xf32>
    %cst_35 = arith.constant 9.99999996E-13 : f32
    %80 = vector.broadcast %cst_35 : f32 to vector<16x1xf32>
    %81 = arith.addf %79, %80 : vector<16x1xf32>
    %82 = math.rsqrt %81 : vector<16x1xf32>
    %83 = vector.broadcast %82 : vector<16x1xf32> to vector<16x32xf32>
    %84 = arith.mulf %74, %83 : vector<16x32xf32>
    %85 = vector.broadcast %66 : vector<1x32xf32> to vector<16x32xf32>
    %86 = arith.mulf %84, %85 : vector<16x32xf32>
    %87 = vector.broadcast %68 : vector<1x32xf32> to vector<16x32xf32>
    %88 = arith.addf %86, %87 : vector<16x32xf32>
    %c0_36 = arith.constant 0 : index
    %c0_37 = arith.constant 0 : index
    %c0_38 = arith.constant 0 : index
    %89 = vector.load %arg11[%c0_36, %c0_37, %c0_38] : memref<1x32x64xf32, #tpu.memory_space<vmem>>, vector<1x32x64xf32>
    %90 = vector.shape_cast %89 : vector<1x32x64xf32> to vector<32x64xf32>
    %cst_39 = arith.constant dense<0.000000e+00> : vector<16x64xf32>
    %91 = tpu.matmul %88, %90, %cst_39 {dimension_numbers = #tpu.dot_dimension_numbers<[1], [0], [0], [1], [0, 0, 1, 1], [], []>} : vector<16x32xf32>, vector<32x64xf32>, vector<16x64xf32> -> vector<16x64xf32>
    %c0_40 = arith.constant 0 : index
    %c0_41 = arith.constant 0 : index
    %c0_42 = arith.constant 0 : index
    %92 = vector.load %arg12[%c0_40, %c0_41, %c0_42] : memref<1x1x64xf32, #tpu.memory_space<vmem>>, vector<1x1x64xf32>
    %93 = vector.shape_cast %92 : vector<1x1x64xf32> to vector<1x64xf32>
    %94 = vector.broadcast %93 : vector<1x64xf32> to vector<16x64xf32>
    %95 = arith.addf %91, %94 : vector<16x64xf32>
    %96 = arith.mulf %95, %95 : vector<16x64xf32>
    %97 = arith.mulf %95, %96 : vector<16x64xf32>
    %cst_43 = arith.constant 4.471500e-02 : f32
    %98 = vector.broadcast %cst_43 : f32 to vector<16x64xf32>
    %99 = arith.mulf %98, %97 : vector<16x64xf32>
    %100 = arith.addf %95, %99 : vector<16x64xf32>
    %cst_44 = arith.constant 0.797884583 : f32
    %101 = vector.broadcast %cst_44 : f32 to vector<16x64xf32>
    %102 = arith.mulf %101, %100 : vector<16x64xf32>
    %103 = math.tanh %102 : vector<16x64xf32>
    %cst_45 = arith.constant 1.000000e+00 : f32
    %104 = vector.broadcast %cst_45 : f32 to vector<16x64xf32>
    %105 = arith.addf %104, %103 : vector<16x64xf32>
    %cst_46 = arith.constant 5.000000e-01 : f32
    %106 = vector.broadcast %cst_46 : f32 to vector<16x64xf32>
    %107 = arith.mulf %106, %105 : vector<16x64xf32>
    %108 = arith.mulf %95, %107 : vector<16x64xf32>
    %c0_47 = arith.constant 0 : index
    %c0_48 = arith.constant 0 : index
    %c0_49 = arith.constant 0 : index
    %109 = vector.load %arg13[%c0_47, %c0_48, %c0_49] : memref<1x64x32xf32, #tpu.memory_space<vmem>>, vector<1x64x32xf32>
    %110 = vector.shape_cast %109 : vector<1x64x32xf32> to vector<64x32xf32>
    %cst_50 = arith.constant dense<0.000000e+00> : vector<16x32xf32>
    %111 = tpu.matmul %108, %110, %cst_50 {dimension_numbers = #tpu.dot_dimension_numbers<[1], [0], [0], [1], [0, 0, 1, 1], [], []>} : vector<16x64xf32>, vector<64x32xf32>, vector<16x32xf32> -> vector<16x32xf32>
    %c0_51 = arith.constant 0 : index
    %c0_52 = arith.constant 0 : index
    %c0_53 = arith.constant 0 : index
    %112 = vector.load %arg14[%c0_51, %c0_52, %c0_53] : memref<1x1x32xf32, #tpu.memory_space<vmem>>, vector<1x1x32xf32>
    %113 = vector.shape_cast %112 : vector<1x1x32xf32> to vector<1x32xf32>
    %114 = vector.broadcast %113 : vector<1x32xf32> to vector<16x32xf32>
    %115 = arith.addf %111, %114 : vector<16x32xf32>
    %116 = arith.addf %88, %115 : vector<16x32xf32>
    %c0_54 = arith.constant 0 : index
    %c0_55 = arith.constant 0 : index
    %c0_56 = arith.constant 0 : index
    %117 = vector.load %arg15[%c0_54, %c0_55, %c0_56] : memref<1x1x32xf32, #tpu.memory_space<vmem>>, vector<1x1x32xf32>
    %118 = vector.shape_cast %117 : vector<1x1x32xf32> to vector<1x32xf32>
    %c0_57 = arith.constant 0 : index
    %c0_58 = arith.constant 0 : index
    %c0_59 = arith.constant 0 : index
    %119 = vector.load %arg16[%c0_57, %c0_58, %c0_59] : memref<1x1x32xf32, #tpu.memory_space<vmem>>, vector<1x1x32xf32>
    %120 = vector.shape_cast %119 : vector<1x1x32xf32> to vector<1x32xf32>
    %cst_60 = arith.constant dense<0.000000e+00> : vector<16xf32>
    %121 = vector.multi_reduction <add>, %116, %cst_60 [1] : vector<16x32xf32> to vector<16xf32>
    %122 = vector.shape_cast %121 : vector<16xf32> to vector<16x1xf32>
    %cst_61 = arith.constant 3.200000e+01 : f32
    %123 = vector.broadcast %cst_61 : f32 to vector<16x1xf32>
    %124 = arith.divf %122, %123 : vector<16x1xf32>
    %125 = vector.broadcast %124 : vector<16x1xf32> to vector<16x32xf32>
    %126 = arith.subf %116, %125 : vector<16x32xf32>
    %127 = arith.mulf %126, %126 : vector<16x32xf32>
    %cst_62 = arith.constant dense<0.000000e+00> : vector<16xf32>
    %128 = vector.multi_reduction <add>, %127, %cst_62 [1] : vector<16x32xf32> to vector<16xf32>
    %129 = vector.shape_cast %128 : vector<16xf32> to vector<16x1xf32>
    %cst_63 = arith.constant 3.200000e+01 : f32
    %130 = vector.broadcast %cst_63 : f32 to vector<16x1xf32>
    %131 = arith.divf %129, %130 : vector<16x1xf32>
    %cst_64 = arith.constant 9.99999996E-13 : f32
    %132 = vector.broadcast %cst_64 : f32 to vector<16x1xf32>
    %133 = arith.addf %131, %132 : vector<16x1xf32>
    %134 = math.rsqrt %133 : vector<16x1xf32>
    %135 = vector.broadcast %134 : vector<16x1xf32> to vector<16x32xf32>
    %136 = arith.mulf %126, %135 : vector<16x32xf32>
    %137 = vector.broadcast %118 : vector<1x32xf32> to vector<16x32xf32>
    %138 = arith.mulf %136, %137 : vector<16x32xf32>
    %139 = vector.broadcast %120 : vector<1x32xf32> to vector<16x32xf32>
    %140 = arith.addf %138, %139 : vector<16x32xf32>
    %c0_65 = arith.constant 0 : index
    %c0_66 = arith.constant 0 : index
    %141 = vector.load %arg17[%c0_65, %c0_66] : memref<16x32xf32, #tpu.memory_space<vmem>>, vector<16x32xf32>
    tpu.vector_store %arg17[%c0_65, %c0_66], %140 {strides = array<i32>} : memref<16x32xf32, #tpu.memory_space<vmem>>, vector<16x32xf32>,
    return
  }
  func.func @transform_0(%arg0: i32) -> (i32, i32) {
    %c0_i32 = arith.constant 0 : i32
    %c0_i32_0 = arith.constant 0 : i32
    %c0_i32_1 = arith.constant 0 : i32
    return %c0_i32, %c0_i32_0 : i32, i32
  }
  func.func @transform_1(%arg0: i32) -> (i32, i32) {
    %c0_i32 = arith.constant 0 : i32
    %c0_i32_0 = arith.constant 0 : i32
    %c0_i32_1 = arith.constant 0 : i32
    return %c0_i32, %c0_i32_0 : i32, i32
  }
  func.func @transform_2(%arg0: i32) -> (i32, i32) {
    %c0_i32 = arith.constant 0 : i32
    %c0_i32_0 = arith.constant 0 : i32
    %c0_i32_1 = arith.constant 0 : i32
    return %c0_i32, %c0_i32_0 : i32, i32
  }
  func.func @transform_3(%arg0: i32) -> (i32, i32) {
    %c0_i32 = arith.constant 0 : i32
    %c0_i32_0 = arith.constant 0 : i32
    %c0_i32_1 = arith.constant 0 : i32
    return %c0_i32, %c0_i32_0 : i32, i32
  }
  func.func @transform_4(%arg0: i32) -> (i32, i32, i32) {
    %c0_i32 = arith.constant 0 : i32
    %c0_i32_0 = arith.constant 0 : i32
    %c0_i32_1 = arith.constant 0 : i32
    return %arg0, %c0_i32, %c0_i32_0 : i32, i32, i32
  }
  func.func @transform_5(%arg0: i32) -> (i32, i32, i32) {
    %c0_i32 = arith.constant 0 : i32
    %c0_i32_0 = arith.constant 0 : i32
    %c0_i32_1 = arith.constant 0 : i32
    return %arg0, %c0_i32, %c0_i32_0 : i32, i32, i32
  }
  func.func @transform_6(%arg0: i32) -> (i32, i32, i32) {
    %c0_i32 = arith.constant 0 : i32
    %c0_i32_0 = arith.constant 0 : i32
    %c0_i32_1 = arith.constant 0 : i32
    return %arg0, %c0_i32, %c0_i32_0 : i32, i32, i32
  }
  func.func @transform_7(%arg0: i32) -> (i32, i32, i32) {
    %c0_i32 = arith.constant 0 : i32
    %c0_i32_0 = arith.constant 0 : i32
    %c0_i32_1 = arith.constant 0 : i32
    return %arg0, %c0_i32, %c0_i32_0 : i32, i32, i32
  }
  func.func @transform_8(%arg0: i32) -> (i32, i32, i32) {
    %c0_i32 = arith.constant 0 : i32
    %c0_i32_0 = arith.constant 0 : i32
    %c0_i32_1 = arith.constant 0 : i32
    return %arg0, %c0_i32, %c0_i32_0 : i32, i32, i32
  }
  func.func @transform_9(%arg0: i32) -> (i32, i32, i32) {
    %c0_i32 = arith.constant 0 : i32
    %c0_i32_0 = arith.constant 0 : i32
    %c0_i32_1 = arith.constant 0 : i32
    return %arg0, %c0_i32, %c0_i32_0 : i32, i32, i32
  }
  func.func @transform_10(%arg0: i32) -> (i32, i32, i32) {
    %c0_i32 = arith.constant 0 : i32
    %c0_i32_0 = arith.constant 0 : i32
    %c0_i32_1 = arith.constant 0 : i32
    return %arg0, %c0_i32, %c0_i32_0 : i32, i32, i32
  }
  func.func @transform_11(%arg0: i32) -> (i32, i32, i32) {
    %c0_i32 = arith.constant 0 : i32
    %c0_i32_0 = arith.constant 0 : i32
    %c0_i32_1 = arith.constant 0 : i32
    return %arg0, %c0_i32, %c0_i32_0 : i32, i32, i32
  }
  func.func @transform_12(%arg0: i32) -> (i32, i32, i32) {
    %c0_i32 = arith.constant 0 : i32
    %c0_i32_0 = arith.constant 0 : i32
    %c0_i32_1 = arith.constant 0 : i32
    return %arg0, %c0_i32, %c0_i32_0 : i32, i32, i32
  }
  func.func @transform_13(%arg0: i32) -> (i32, i32, i32) {
    %c0_i32 = arith.constant 0 : i32
    %c0_i32_0 = arith.constant 0 : i32
    %c0_i32_1 = arith.constant 0 : i32
    return %arg0, %c0_i32, %c0_i32_0 : i32, i32, i32
  }
  func.func @transform_14(%arg0: i32) -> (i32, i32, i32) {
    %c0_i32 = arith.constant 0 : i32
    %c0_i32_0 = arith.constant 0 : i32
    %c0_i32_1 = arith.constant 0 : i32
    return %arg0, %c0_i32, %c0_i32_0 : i32, i32, i32
  }
  func.func @transform_15(%arg0: i32) -> (i32, i32, i32) {
    %c0_i32 = arith.constant 0 : i32
    %c0_i32_0 = arith.constant 0 : i32
    %c0_i32_1 = arith.constant 0 : i32
    return %arg0, %c0_i32, %c0_i32_0 : i32, i32, i32
  }
  func.func @transform_16(%arg0: i32) -> (i32, i32) {
    %c0_i32 = arith.constant 0 : i32
    %c0_i32_0 = arith.constant 0 : i32
    %c0_i32_1 = arith.constant 0 : i32
    return %c0_i32, %c0_i32_0 : i32, i32
  }
}

</mosaic_0001>

<llo_original>
// kernel: tpu_custom_call.1
$region0: #{tpu_custom_call.1}
  #allocation0 [shape = 'u32[]', space=smem, size = 0x4, offset = 0x4, fixed_abs, tag = 'smem constant byte address 0x4 - core index']
  #allocation1 [shape = 'u32[72,128]{1,0:T(1,128)}', space=vmem, size = 0x9000, scoped, tag = 'internal scratch']
  %s0 = inlined_call_operand.hbm [shape: f32[16,32], index: 0, kind: input, shape index: {}]
  %s1 = inlined_call_operand.hbm [shape: f32[2,8], index: 1, kind: input, shape index: {}]
  %s2 = inlined_call_operand.hbm [shape: f32[1,32], index: 2, kind: input, shape index: {}]
  %s3 = inlined_call_operand.hbm [shape: f32[1,32], index: 3, kind: input, shape index: {}]
  %s4 = inlined_call_operand.vmem [shape: f32[2,32,96], index: 4, kind: input, shape index: {}]
  %s5 = inlined_call_operand.vmem [shape: f32[2,1,96], index: 5, kind: input, shape index: {}]
  %s6 = inlined_call_operand.vmem [shape: f32[2,32,32], index: 6, kind: input, shape index: {}]
  %s7 = inlined_call_operand.vmem [shape: f32[2,1,32], index: 7, kind: input, shape index: {}]
  %s8 = inlined_call_operand.hbm [shape: f32[2,1,32], index: 8, kind: input, shape index: {}]
  %s9 = inlined_call_operand.vmem [shape: f32[2,1,32], index: 9, kind: input, shape index: {}]
  %s10 = inlined_call_operand.vmem [shape: f32[2,32,64], index: 10, kind: input, shape index: {}]
  %s11 = inlined_call_operand.vmem [shape: f32[2,1,64], index: 11, kind: input, shape index: {}]
  %s12 = inlined_call_operand.vmem [shape: f32[2,64,32], index: 12, kind: input, shape index: {}]
  %s13 = inlined_call_operand.vmem [shape: f32[2,1,32], index: 13, kind: input, shape index: {}]
  %s14 = inlined_call_operand.hbm [shape: f32[2,1,32], index: 14, kind: input, shape index: {}]
  %s15 = inlined_call_operand.vmem [shape: f32[2,1,32], index: 15, kind: input, shape index: {}]
  %s16 = inlined_call_operand.hbm [shape: f32[16,32], index: 16, kind: output, shape index: {}]
  %s17 = sld [smem:[#allocation0]]
  $region125: #{tpu_custom_call.1} parent=0
    _
  %s19 = ssub.s32 1, %s17
  %s20 = scalar_select 0, %s19, %s17
  $region1: #{tpu_custom_call.1} parent=0
    #allocation2 [shape = 'u8[8192]{0}', space=vmem, size = 0x2000, scoped, tag = 'input window, operand 0, single buffered']
    #allocation3 [shape = 's32[2]{0}', space=sflag, size = 0x8, scoped, tag = 'scoped memory for tpu_custom_call.1']
    #allocation4 [shape = 's32[2]{0}', space=sflag, size = 0x8, scoped, tag = 'scoped memory for tpu_custom_call.1']
    #allocation5 [shape = 'u8[1024]{0}', space=vmem, size = 0x400, scoped, tag = 'input window, operand 1, single buffered']
    #allocation6 [shape = 's32[1]{0}', space=sflag, size = 0x4, scoped, tag = 'scoped memory for tpu_custom_call.1']
    #allocation7 [shape = 'u8[512]{0}', space=vmem, size = 0x400, scoped, tag = 'input window, operand 2, single buffered']
    #allocation8 [shape = 'u8[512]{0}', space=vmem, size = 0x400, scoped, tag = 'input window, operand 3, single buffered']
    #allocation9 [shape = 's32[1]{0}', space=sflag, size = 0x4, scoped, tag = 'scoped memory for tpu_custom_call.1']
    #allocation10 [shape = 'u8[1024]{0}', space=vmem, size = 0x400, scoped, tag = 'input window, operand 8']
    #allocation11 [shape = 'u8[1024]{0}', space=vmem, size = 0x400, scoped, tag = 'input window, operand 14']
    #allocation12 [shape = 'u8[8192]{0}', space=vmem, size = 0x2000, scoped, tag = 'output window, operand 0, single buffered']
    %21 = vsyncpa [#allocation3], 0
    %22 = vsyncpa [#allocation6], 0
    %23 = vsyncpa [#allocation9], 0
    %24 = vsyncpa [#allocation4], 0
    loop: start=0, step=1, limit=4
    $region2: #{tpu_custom_call.1} parent=1 // loop_pre_header
      _
    $region3: #{tpu_custom_call.1} parent=1 // loop_header
      %s26 = sphi 0, %s30
      %p27 = scmp.ge.s32.totalorder %s26, 4
      %s34 = sphi 0, %s34
      %s36 = sphi 0, %s34
      %s37 = sphi 0, %s36
      %s51 = sphi 0, %s37
      %s55 = sphi 0, %s55
      %s57 = sphi 0, %s55
      %s58 = sphi 0, %s57
      %s72 = sphi 0, %s58
      %s76 = sphi 0, %s76
      %s78 = sphi 0, %s76
      %s79 = sphi 0, %s78
      %s93 = sphi 0, %s79
      %s97 = sphi 0, %s97
      %s99 = sphi 0, %s97
      %s100 = sphi 0, %s99
      %s114 = sphi 0, %s100
      %s120 = sphi 0, %s122
      %s123 = sphi 0, %s120
      %s124 = sphi 0, %s123
      %s140 = sphi 0, %s124
      %s146 = sphi 0, %s148
      %s149 = sphi 0, %s146
      %s150 = sphi 0, %s149
      %s166 = sphi 0, %s150
      %s172 = sphi 0, %s174
      %s175 = sphi 0, %s172
      %s176 = sphi 0, %s175
      %s192 = sphi 0, %s176
      %s198 = sphi 0, %s200
      %s201 = sphi 0, %s198
      %s202 = sphi 0, %s201
      %s218 = sphi 0, %s202
      %s224 = sphi 0, %s226
      %s227 = sphi 0, %s224
      %s228 = sphi 0, %s227
      %s244 = sphi 0, %s228
      %s250 = sphi 0, %s252
      %s253 = sphi 0, %s250
      %s254 = sphi 0, %s253
      %s270 = sphi 0, %s254
      %s276 = sphi 0, %s278
      %s279 = sphi 0, %s276
      %s280 = sphi 0, %s279
      %s296 = sphi 0, %s280
      %s302 = sphi 0, %s304
      %s305 = sphi 0, %s302
      %s306 = sphi 0, %s305
      %s322 = sphi 0, %s306
      %s328 = sphi 0, %s330
      %s331 = sphi 0, %s328
      %s332 = sphi 0, %s331
      %s348 = sphi 0, %s332
      %s354 = sphi 0, %s356
      %s357 = sphi 0, %s354
      %s358 = sphi 0, %s357
      %s374 = sphi 0, %s358
      %s380 = sphi 0, %s382
      %s383 = sphi 0, %s380
      %s384 = sphi 0, %s383
      %s400 = sphi 0, %s384
      %s406 = sphi 0, %s408
      %s409 = sphi 0, %s406
      %s410 = sphi 0, %s409
      %s426 = sphi 0, %s410
      %s430 = sphi 0, %s430
      %s432 = sphi 0, %s430
      %s433 = sphi 0, %s432
      %s447 = sphi 0, %s433
    $region4: #{tpu_custom_call.1} parent=1 // loop_header_branch
      %29 = sbr.rel (%p27) target = $region8
    $region5: #{tpu_custom_call.1} parent=1 // loop_body
      %s31 = ssub.s32 %s26, 1
      %s32 = ssub.s32 %s26, 2
      %s33 = sadd.s32 %s26, 1
      %s35 = sadd.s32 %s34, 1
      %p38 = scmp.eq.s32.totalorder %s26, 1
      %p39 = scmp.ne.s32.totalorder %s34, %s36
      %p40 = scmp.eq.s32.totalorder %s26, 0
      %p41 = por %p39, %p40
      %p42 = scmp.ne.s32.totalorder %s34, %s36
      %p43 = scmp.eq.s32.totalorder %s31, 1
      %p44 = por %p42, %p43
      %p45 = scmp.ne.s32.totalorder %s36, %s37
      %p46 = scmp.eq.s32.totalorder %s31, 0
      %p47 = por %p45, %p46
      %p48 = scmp.ne.s32.totalorder %s36, %s37
      %p49 = scmp.eq.s32.totalorder %s32, 1
      %p50 = por %p48, %p49
      %p52 = scmp.ne.s32.totalorder %s37, %s51
      %p53 = scmp.eq.s32.totalorder %s32, 0
      %p54 = por %p52, %p53
      %s56 = sadd.s32 %s55, 1
      %p59 = scmp.eq.s32.totalorder %s26, 1
      %p60 = scmp.ne.s32.totalorder %s55, %s57
      %p61 = scmp.eq.s32.totalorder %s26, 0
      %p62 = por %p60, %p61
      %p63 = scmp.ne.s32.totalorder %s55, %s57
      %p64 = scmp.eq.s32.totalorder %s31, 1
      %p65 = por %p63, %p64
      %p66 = scmp.ne.s32.totalorder %s57, %s58
      %p67 = scmp.eq.s32.totalorder %s31, 0
      %p68 = por %p66, %p67
      %p69 = scmp.ne.s32.totalorder %s57, %s58
      %p70 = scmp.eq.s32.totalorder %s32, 1
      %p71 = por %p69, %p70
      %p73 = scmp.ne.s32.totalorder %s58, %s72
      %p74 = scmp.eq.s32.totalorder %s32, 0
      %p75 = por %p73, %p74
      %s77 = sadd.s32 %s76, 1
      %p80 = scmp.eq.s32.totalorder %s26, 1
      %p81 = scmp.ne.s32.totalorder %s76, %s78
      %p82 = scmp.eq.s32.totalorder %s26, 0
      %p83 = por %p81, %p82
      %p84 = scmp.ne.s32.totalorder %s76, %s78
      %p85 = scmp.eq.s32.totalorder %s31, 1
      %p86 = por %p84, %p85
      %p87 = scmp.ne.s32.totalorder %s78, %s79
      %p88 = scmp.eq.s32.totalorder %s31, 0
      %p89 = por %p87, %p88
      %p90 = scmp.ne.s32.totalorder %s78, %s79
      %p91 = scmp.eq.s32.totalorder %s32, 1
      %p92 = por %p90, %p91
      %p94 = scmp.ne.s32.totalorder %s79, %s93
      %p95 = scmp.eq.s32.totalorder %s32, 0
      %p96 = por %p94, %p95
      %s98 = sadd.s32 %s97, 1
      %p101 = scmp.eq.s32.totalorder %s26, 1
      %p102 = scmp.ne.s32.totalorder %s97, %s99
      %p103 = scmp.eq.s32.totalorder %s26, 0
      %p104 = por %p102, %p103
      %p105 = scmp.ne.s32.totalorder %s97, %s99
      %p106 = scmp.eq.s32.totalorder %s31, 1
      %p107 = por %p105, %p106
      %p108 = scmp.ne.s32.totalorder %s99, %s100
      %p109 = scmp.eq.s32.totalorder %s31, 0
      %p110 = por %p108, %p109
      %p111 = scmp.ne.s32.totalorder %s99, %s100
      %p112 = scmp.eq.s32.totalorder %s32, 1
      %p113 = por %p111, %p112
      %p115 = scmp.ne.s32.totalorder %s100, %s114
      %p116 = scmp.eq.s32.totalorder %s32, 0
      %p117 = por %p115, %p116
      %s118 = ssub.s32 %s26, %s33
      %p119 = scmp.eq.s32.totalorder %s118, 0
      %s121 = sadd.s32 %s120, 1
      %s122 = scalar_select %p119, %s120, %s121
      %p125 = pneg %p119
      %p126 = scmp.eq.s32.totalorder %s26, 1
      %p127 = por %p125, %p126
      %p128 = scmp.ne.s32.totalorder %s120, %s123
      %p129 = scmp.eq.s32.totalorder %s26, 0
      %p130 = por %p128, %p129
      %p131 = scmp.ne.s32.totalorder %s120, %s123
      %p132 = scmp.eq.s32.totalorder %s31, 1
      %p133 = por %p131, %p132
      %p134 = scmp.ne.s32.totalorder %s123, %s124
      %p135 = scmp.eq.s32.totalorder %s31, 0
      %p136 = por %p134, %p135
      %p137 = scmp.ne.s32.totalorder %s123, %s124
      %p138 = scmp.eq.s32.totalorder %s32, 1
      %p139 = por %p137, %p138
      %p141 = scmp.ne.s32.totalorder %s124, %s140
      %p142 = scmp.eq.s32.totalorder %s32, 0
      %p143 = por %p141, %p142
      %s144 = ssub.s32 %s26, %s33
      %p145 = scmp.eq.s32.totalorder %s144, 0
      %s147 = sadd.s32 %s146, 1
      %s148 = scalar_select %p145, %s146, %s147
      %p151 = pneg %p145
      %p152 = scmp.eq.s32.totalorder %s26, 1
      %p153 = por %p151, %p152
      %p154 = scmp.ne.s32.totalorder %s146, %s149
      %p155 = scmp.eq.s32.totalorder %s26, 0
      %p156 = por %p154, %p155
      %p157 = scmp.ne.s32.totalorder %s146, %s149
      %p158 = scmp.eq.s32.totalorder %s31, 1
      %p159 = por %p157, %p158
      %p160 = scmp.ne.s32.totalorder %s149, %s150
      %p161 = scmp.eq.s32.totalorder %s31, 0
      %p162 = por %p160, %p161
      %p163 = scmp.ne.s32.totalorder %s149, %s150
      %p164 = scmp.eq.s32.totalorder %s32, 1
      %p165 = por %p163, %p164
      %p167 = scmp.ne.s32.totalorder %s150, %s166
      %p168 = scmp.eq.s32.totalorder %s32, 0
      %p169 = por %p167, %p168
      %s170 = ssub.s32 %s26, %s33
      %p171 = scmp.eq.s32.totalorder %s170, 0
      %s173 = sadd.s32 %s172, 1
      %s174 = scalar_select %p171, %s172, %s173
      %p177 = pneg %p171
      %p178 = scmp.eq.s32.totalorder %s26, 1
      %p179 = por %p177, %p178
      %p180 = scmp.ne.s32.totalorder %s172, %s175
      %p181 = scmp.eq.s32.totalorder %s26, 0
      %p182 = por %p180, %p181
      %p183 = scmp.ne.s32.totalorder %s172, %s175
      %p184 = scmp.eq.s32.totalorder %s31, 1
      %p185 = por %p183, %p184
      %p186 = scmp.ne.s32.totalorder %s175, %s176
      %p187 = scmp.eq.s32.totalorder %s31, 0
      %p188 = por %p186, %p187
      %p189 = scmp.ne.s32.totalorder %s175, %s176
      %p190 = scmp.eq.s32.totalorder %s32, 1
      %p191 = por %p189, %p190
      %p193 = scmp.ne.s32.totalorder %s176, %s192
      %p194 = scmp.eq.s32.totalorder %s32, 0
      %p195 = por %p193, %p194
      %s196 = ssub.s32 %s26, %s33
      %p197 = scmp.eq.s32.totalorder %s196, 0
      %s199 = sadd.s32 %s198, 1
      %s200 = scalar_select %p197, %s198, %s199
      %p203 = pneg %p197
      %p204 = scmp.eq.s32.totalorder %s26, 1
      %p205 = por %p203, %p204
      %p206 = scmp.ne.s32.totalorder %s198, %s201
      %p207 = scmp.eq.s32.totalorder %s26, 0
      %p208 = por %p206, %p207
      %p209 = scmp.ne.s32.totalorder %s198, %s201
      %p210 = scmp.eq.s32.totalorder %s31, 1
      %p211 = por %p209, %p210
      %p212 = scmp.ne.s32.totalorder %s201, %s202
      %p213 = scmp.eq.s32.totalorder %s31, 0
      %p214 = por %p212, %p213
      %p215 = scmp.ne.s32.totalorder %s201, %s202
      %p216 = scmp.eq.s32.totalorder %s32, 1
      %p217 = por %p215, %p216
      %p219 = scmp.ne.s32.totalorder %s202, %s218
      %p220 = scmp.eq.s32.totalorder %s32, 0
      %p221 = por %p219, %p220
      %s222 = ssub.s32 %s26, %s33
      %p223 = scmp.eq.s32.totalorder %s222, 0
      %s225 = sadd.s32 %s224, 1
      %s226 = scalar_select %p223, %s224, %s225
      %p229 = pneg %p223
      %p230 = scmp.eq.s32.totalorder %s26, 1
      %p231 = por %p229, %p230
      %p232 = scmp.ne.s32.totalorder %s224, %s227
      %p233 = scmp.eq.s32.totalorder %s26, 0
      %p234 = por %p232, %p233
      %p235 = scmp.ne.s32.totalorder %s224, %s227
      %p236 = scmp.eq.s32.totalorder %s31, 1
      %p237 = por %p235, %p236
      %p238 = scmp.ne.s32.totalorder %s227, %s228
      %p239 = scmp.eq.s32.totalorder %s31, 0
      %p240 = por %p238, %p239
      %p241 = scmp.ne.s32.totalorder %s227, %s228
      %p242 = scmp.eq.s32.totalorder %s32, 1
      %p243 = por %p241, %p242
      %p245 = scmp.ne.s32.totalorder %s228, %s244
      %p246 = scmp.eq.s32.totalorder %s32, 0
      %p247 = por %p245, %p246
      %s248 = ssub.s32 %s26, %s33
      %p249 = scmp.eq.s32.totalorder %s248, 0
      %s251 = sadd.s32 %s250, 1
      %s252 = scalar_select %p249, %s250, %s251
      %p255 = pneg %p249
      %p256 = scmp.eq.s32.totalorder %s26, 1
      %p257 = por %p255, %p256
      %p258 = scmp.ne.s32.totalorder %s250, %s253
      %p259 = scmp.eq.s32.totalorder %s26, 0
      %p260 = por %p258, %p259
      %p261 = scmp.ne.s32.totalorder %s250, %s253
      %p262 = scmp.eq.s32.totalorder %s31, 1
      %p263 = por %p261, %p262
      %p264 = scmp.ne.s32.totalorder %s253, %s254
      %p265 = scmp.eq.s32.totalorder %s31, 0
      %p266 = por %p264, %p265
      %p267 = scmp.ne.s32.totalorder %s253, %s254
      %p268 = scmp.eq.s32.totalorder %s32, 1
      %p269 = por %p267, %p268
      %p271 = scmp.ne.s32.totalorder %s254, %s270
      %p272 = scmp.eq.s32.totalorder %s32, 0
      %p273 = por %p271, %p272
      %s274 = ssub.s32 %s26, %s33
      %p275 = scmp.eq.s32.totalorder %s274, 0
      %s277 = sadd.s32 %s276, 1
      %s278 = scalar_select %p275, %s276, %s277
      %p281 = pneg %p275
      %p282 = scmp.eq.s32.totalorder %s26, 1
      %p283 = por %p281, %p282
      %p284 = scmp.ne.s32.totalorder %s276, %s279
      %p285 = scmp.eq.s32.totalorder %s26, 0
      %p286 = por %p284, %p285
      %p287 = scmp.ne.s32.totalorder %s276, %s279
      %p288 = scmp.eq.s32.totalorder %s31, 1
      %p289 = por %p287, %p288
      %p290 = scmp.ne.s32.totalorder %s279, %s280
      %p291 = scmp.eq.s32.totalorder %s31, 0
      %p292 = por %p290, %p291
      %p293 = scmp.ne.s32.totalorder %s279, %s280
      %p294 = scmp.eq.s32.totalorder %s32, 1
      %p295 = por %p293, %p294
      %p297 = scmp.ne.s32.totalorder %s280, %s296
      %p298 = scmp.eq.s32.totalorder %s32, 0
      %p299 = por %p297, %p298
      %s300 = ssub.s32 %s26, %s33
      %p301 = scmp.eq.s32.totalorder %s300, 0
      %s303 = sadd.s32 %s302, 1
      %s304 = scalar_select %p301, %s302, %s303
      %p307 = pneg %p301
      %p308 = scmp.eq.s32.totalorder %s26, 1
      %p309 = por %p307, %p308
      %p310 = scmp.ne.s32.totalorder %s302, %s305
      %p311 = scmp.eq.s32.totalorder %s26, 0
      %p312 = por %p310, %p311
      %p313 = scmp.ne.s32.totalorder %s302, %s305
      %p314 = scmp.eq.s32.totalorder %s31, 1
      %p315 = por %p313, %p314
      %p316 = scmp.ne.s32.totalorder %s305, %s306
      %p317 = scmp.eq.s32.totalorder %s31, 0
      %p318 = por %p316, %p317
      %p319 = scmp.ne.s32.totalorder %s305, %s306
      %p320 = scmp.eq.s32.totalorder %s32, 1
      %p321 = por %p319, %p320
      %p323 = scmp.ne.s32.totalorder %s306, %s322
      %p324 = scmp.eq.s32.totalorder %s32, 0
      %p325 = por %p323, %p324
      %s326 = ssub.s32 %s26, %s33
      %p327 = scmp.eq.s32.totalorder %s326, 0
      %s329 = sadd.s32 %s328, 1
      %s330 = scalar_select %p327, %s328, %s329
      %p333 = pneg %p327
      %p334 = scmp.eq.s32.totalorder %s26, 1
      %p335 = por %p333, %p334
      %p336 = scmp.ne.s32.totalorder %s328, %s331
      %p337 = scmp.eq.s32.totalorder %s26, 0
      %p338 = por %p336, %p337
      %p339 = scmp.ne.s32.totalorder %s328, %s331
      %p340 = scmp.eq.s32.totalorder %s31, 1
      %p341 = por %p339, %p340
      %p342 = scmp.ne.s32.totalorder %s331, %s332
      %p343 = scmp.eq.s32.totalorder %s31, 0
      %p344 = por %p342, %p343
      %p345 = scmp.ne.s32.totalorder %s331, %s332
      %p346 = scmp.eq.s32.totalorder %s32, 1
      %p347 = por %p345, %p346
      %p349 = scmp.ne.s32.totalorder %s332, %s348
      %p350 = scmp.eq.s32.totalorder %s32, 0
      %p351 = por %p349, %p350
      %s352 = ssub.s32 %s26, %s33
      %p353 = scmp.eq.s32.totalorder %s352, 0
      %s355 = sadd.s32 %s354, 1
      %s356 = scalar_select %p353, %s354, %s355
      %p359 = pneg %p353
      %p360 = scmp.eq.s32.totalorder %s26, 1
      %p361 = por %p359, %p360
      %p362 = scmp.ne.s32.totalorder %s354, %s357
      %p363 = scmp.eq.s32.totalorder %s26, 0
      %p364 = por %p362, %p363
      %p365 = scmp.ne.s32.totalorder %s354, %s357
      %p366 = scmp.eq.s32.totalorder %s31, 1
      %p367 = por %p365, %p366
      %p368 = scmp.ne.s32.totalorder %s357, %s358
      %p369 = scmp.eq.s32.totalorder %s31, 0
      %p370 = por %p368, %p369
      %p371 = scmp.ne.s32.totalorder %s357, %s358
      %p372 = scmp.eq.s32.totalorder %s32, 1
      %p373 = por %p371, %p372
      %p375 = scmp.ne.s32.totalorder %s358, %s374
      %p376 = scmp.eq.s32.totalorder %s32, 0
      %p377 = por %p375, %p376
      %s378 = ssub.s32 %s26, %s33
      %p379 = scmp.eq.s32.totalorder %s378, 0
      %s381 = sadd.s32 %s380, 1
      %s382 = scalar_select %p379, %s380, %s381
      %p385 = pneg %p379
      %p386 = scmp.eq.s32.totalorder %s26, 1
      %p387 = por %p385, %p386
      %p388 = scmp.ne.s32.totalorder %s380, %s383
      %p389 = scmp.eq.s32.totalorder %s26, 0
      %p390 = por %p388, %p389
      %p391 = scmp.ne.s32.totalorder %s380, %s383
      %p392 = scmp.eq.s32.totalorder %s31, 1
      %p393 = por %p391, %p392
      %p394 = scmp.ne.s32.totalorder %s383, %s384
      %p395 = scmp.eq.s32.totalorder %s31, 0
      %p396 = por %p394, %p395
      %p397 = scmp.ne.s32.totalorder %s383, %s384
      %p398 = scmp.eq.s32.totalorder %s32, 1
      %p399 = por %p397, %p398
      %p401 = scmp.ne.s32.totalorder %s384, %s400
      %p402 = scmp.eq.s32.totalorder %s32, 0
      %p403 = por %p401, %p402
      %s404 = ssub.s32 %s26, %s33
      %p405 = scmp.eq.s32.totalorder %s404, 0
      %s407 = sadd.s32 %s406, 1
      %s408 = scalar_select %p405, %s406, %s407
      %p411 = pneg %p405
      %p412 = scmp.eq.s32.totalorder %s26, 1
      %p413 = por %p411, %p412
      %p414 = scmp.ne.s32.totalorder %s406, %s409
      %p415 = scmp.eq.s32.totalorder %s26, 0
      %p416 = por %p414, %p415
      %p417 = scmp.ne.s32.totalorder %s406, %s409
      %p418 = scmp.eq.s32.totalorder %s31, 1
      %p419 = por %p417, %p418
      %p420 = scmp.ne.s32.totalorder %s409, %s410
      %p421 = scmp.eq.s32.totalorder %s31, 0
      %p422 = por %p420, %p421
      %p423 = scmp.ne.s32.totalorder %s409, %s410
      %p424 = scmp.eq.s32.totalorder %s32, 1
      %p425 = por %p423, %p424
      %p427 = scmp.ne.s32.totalorder %s410, %s426
      %p428 = scmp.eq.s32.totalorder %s32, 0
      %p429 = por %p427, %p428
      %s431 = sadd.s32 %s430, 1
      %p434 = scmp.eq.s32.totalorder %s26, 1
      %p435 = scmp.ne.s32.totalorder %s430, %s432
      %p436 = scmp.eq.s32.totalorder %s26, 0
      %p437 = por %p435, %p436
      %p438 = scmp.ne.s32.totalorder %s430, %s432
      %p439 = scmp.eq.s32.totalorder %s31, 1
      %p440 = por %p438, %p439
      %p441 = scmp.ne.s32.totalorder %s432, %s433
      %p442 = scmp.eq.s32.totalorder %s31, 0
      %p443 = por %p441, %p442
      %p444 = scmp.ne.s32.totalorder %s432, %s433
      %p445 = scmp.eq.s32.totalorder %s32, 1
      %p446 = por %p444, %p445
      %p448 = scmp.ne.s32.totalorder %s433, %s447
      %p449 = scmp.eq.s32.totalorder %s32, 0
      %p450 = por %p448, %p449
      %p451 = scmp.le.s32.totalorder 1, %s26
      %p452 = scmp.lt.s32.totalorder %s26, 3
      %p453 = pnand %p451, %p452
      %p454 = pneg %p453
      // Predicated region
      $region9: #{tpu_custom_call.1} parent=5 // pred_check
        _
      $region10: #{tpu_custom_call.1} parent=5 // pred_check_branch
        %456 = sbr.rel (%p453) target = $region12
      $region11: #{tpu_custom_call.1} parent=5 // pred_region
        %s457 = ssub.s32 %s26, 1
        // Predicated region
        $region13: #{tpu_custom_call.1} parent=11 // pred_check
          %p458 = pneg %p47
        $region14: #{tpu_custom_call.1} parent=11 // pred_check_branch
          %460 = sbr.rel (%p458) target = $region16
        $region15: #{tpu_custom_call.1} parent=11 // pred_region
          %462 = vsyncadd [#allocation3], 0
          %s463 = sshll.u32 %s0, 4
          %s464 = int_to_ptr.hbm [resolvable:$true] %s463
          %s465 = sshll.u32 [#allocation2], 4
          %s466 = int_to_ptr.vmem [resolvable:$true] %s465
          %471 = dma.hbm_to_vmem [thread:$0]  %s464, 256, %s466, [#allocation3], 128, 128, 8
        $region16: #{tpu_custom_call.1} parent=11 // pred_fallthru
          _
        // Predicated region
        $region17: #{tpu_custom_call.1} parent=11 // pred_check
          %p472 = pneg %p68
        $region18: #{tpu_custom_call.1} parent=11 // pred_check_branch
          %474 = sbr.rel (%p472) target = $region20
        $region19: #{tpu_custom_call.1} parent=11 // pred_region
          %476 = vsyncadd [#allocation6], 0
          %s478 = sshll.u32 %s1, 4
          %s479 = int_to_ptr.hbm [resolvable:$true] %s478
          %s480 = sshll.u32 [#allocation5], 4
          %s481 = int_to_ptr.vmem [resolvable:$true] %s480
          %483 = dma.hbm_to_vmem [thread:$0]  %s479, 32, %s481, [#allocation6]
        $region20: #{tpu_custom_call.1} parent=11 // pred_fallthru
          _
        // Predicated region
        $region21: #{tpu_custom_call.1} parent=11 // pred_check
          %p484 = pneg %p89
        $region22: #{tpu_custom_call.1} parent=11 // pred_check_branch
          %486 = sbr.rel (%p484) target = $region24
        $region23: #{tpu_custom_call.1} parent=11 // pred_region
          %488 = vsyncadd [#allocation6], 0
          %s490 = sshll.u32 %s2, 4
          %s491 = int_to_ptr.hbm [resolvable:$true] %s490
          %s492 = sshll.u32 [#allocation7], 4
          %s493 = int_to_ptr.vmem [resolvable:$true] %s492
          %495 = dma.hbm_to_vmem [thread:$0]  %s491, 16, %s493, [#allocation6]
        $region24: #{tpu_custom_call.1} parent=11 // pred_fallthru
          _
        // Predicated region
        $region25: #{tpu_custom_call.1} parent=11 // pred_check
          %p496 = pneg %p110
        $region26: #{tpu_custom_call.1} parent=11 // pred_check_branch
          %498 = sbr.rel (%p496) target = $region28
        $region27: #{tpu_custom_call.1} parent=11 // pred_region
          %500 = vsyncadd [#allocation9], 0
          %s502 = sshll.u32 %s3, 4
          %s503 = int_to_ptr.hbm [resolvable:$true] %s502
          %s504 = sshll.u32 [#allocation8], 4
          %s505 = int_to_ptr.vmem [resolvable:$true] %s504
          %507 = dma.hbm_to_vmem [thread:$0]  %s503, 16, %s505, [#allocation9]
        $region28: #{tpu_custom_call.1} parent=11 // pred_fallthru
          _
      $region12: #{tpu_custom_call.1} parent=5 // pred_fallthru
        _
      %p508 = scmp.lt.s32.totalorder %s26, 2
      // Predicated region
      $region29: #{tpu_custom_call.1} parent=5 // pred_check
        %p509 = pneg %p508
      $region30: #{tpu_custom_call.1} parent=5 // pred_check_branch
        %511 = sbr.rel (%p509) target = $region32
      $region31: #{tpu_custom_call.1} parent=5 // pred_region
        // Predicated region
        $region33: #{tpu_custom_call.1} parent=31 // pred_check
          %p512 = pneg %p130
        $region34: #{tpu_custom_call.1} parent=31 // pred_check_branch
          %514 = sbr.rel (%p512) target = $region36
        $region35: #{tpu_custom_call.1} parent=31 // pred_region
          %p515 = scmp.lt.s32.totalorder %s26, 1
          %s516 = scalar_select %p515, %s26, 1
          %s517 = smul.addr %s516, 4
          %s518 = smul.addr %s517, 8
          %s519 = scalar_lea.vmem %s4, %s518
        $region36: #{tpu_custom_call.1} parent=31 // pred_fallthru
          _
        // Predicated region
        $region37: #{tpu_custom_call.1} parent=31 // pred_check
          %p520 = pneg %p156
        $region38: #{tpu_custom_call.1} parent=31 // pred_check_branch
          %522 = sbr.rel (%p520) target = $region40
        $region39: #{tpu_custom_call.1} parent=31 // pred_region
          %p523 = scmp.lt.s32.totalorder %s26, 1
          %s524 = scalar_select %p523, %s26, 1
          %s525 = scalar_lea.vmem %s5, %s524
        $region40: #{tpu_custom_call.1} parent=31 // pred_fallthru
          _
        // Predicated region
        $region41: #{tpu_custom_call.1} parent=31 // pred_check
          %p526 = pneg %p182
        $region42: #{tpu_custom_call.1} parent=31 // pred_check_branch
          %528 = sbr.rel (%p526) target = $region44
        $region43: #{tpu_custom_call.1} parent=31 // pred_region
          %p529 = scmp.lt.s32.totalorder %s26, 1
          %s530 = scalar_select %p529, %s26, 1
          %s531 = smul.addr %s530, 4
          %s532 = smul.addr %s531, 8
          %s533 = scalar_lea.vmem %s6, %s532
        $region44: #{tpu_custom_call.1} parent=31 // pred_fallthru
          _
        // Predicated region
        $region45: #{tpu_custom_call.1} parent=31 // pred_check
          %p534 = pneg %p208
        $region46: #{tpu_custom_call.1} parent=31 // pred_check_branch
          %536 = sbr.rel (%p534) target = $region48
        $region47: #{tpu_custom_call.1} parent=31 // pred_region
          %p537 = scmp.lt.s32.totalorder %s26, 1
          %s538 = scalar_select %p537, %s26, 1
          %s539 = scalar_lea.vmem %s7, %s538
        $region48: #{tpu_custom_call.1} parent=31 // pred_fallthru
          _
        // Predicated region
        $region49: #{tpu_custom_call.1} parent=31 // pred_check
          %p540 = pneg %p234
        $region50: #{tpu_custom_call.1} parent=31 // pred_check_branch
          %542 = sbr.rel (%p540) target = $region52
        $region51: #{tpu_custom_call.1} parent=31 // pred_region
          %s543 = sand.u32 %s26, 1
          %s544 = scalar_lea.sflag [#allocation3], %s543
          %s545 = sand.u32 %s224, 1
          %s546 = scalar_lea.vmem [#allocation10], %s545
          %548 = vsyncadd %s544, 0
          %s549 = scalar_lea.hbm %s8, %s26
          %s551 = sshll.u32 %s549, 4
          %s552 = int_to_ptr.hbm [resolvable:$true] %s551
          %s553 = sshll.u32 %s546, 4
          %s554 = int_to_ptr.vmem [resolvable:$true] %s553
          %556 = dma.hbm_to_vmem [thread:$0]  %s552, 16, %s554, %s544
        $region52: #{tpu_custom_call.1} parent=31 // pred_fallthru
          _
        // Predicated region
        $region53: #{tpu_custom_call.1} parent=31 // pred_check
          %p557 = pneg %p260
        $region54: #{tpu_custom_call.1} parent=31 // pred_check_branch
          %559 = sbr.rel (%p557) target = $region56
        $region55: #{tpu_custom_call.1} parent=31 // pred_region
          %p560 = scmp.lt.s32.totalorder %s26, 1
          %s561 = scalar_select %p560, %s26, 1
          %s562 = scalar_lea.vmem %s9, %s561
        $region56: #{tpu_custom_call.1} parent=31 // pred_fallthru
          _
        // Predicated region
        $region57: #{tpu_custom_call.1} parent=31 // pred_check
          %p563 = pneg %p286
        $region58: #{tpu_custom_call.1} parent=31 // pred_check_branch
          %565 = sbr.rel (%p563) target = $region60
        $region59: #{tpu_custom_call.1} parent=31 // pred_region
          %p566 = scmp.lt.s32.totalorder %s26, 1
          %s567 = scalar_select %p566, %s26, 1
          %s568 = smul.addr %s567, 4
          %s569 = smul.addr %s568, 8
          %s570 = scalar_lea.vmem %s10, %s569
        $region60: #{tpu_custom_call.1} parent=31 // pred_fallthru
          _
        // Predicated region
        $region61: #{tpu_custom_call.1} parent=31 // pred_check
          %p571 = pneg %p312
        $region62: #{tpu_custom_call.1} parent=31 // pred_check_branch
          %573 = sbr.rel (%p571) target = $region64
        $region63: #{tpu_custom_call.1} parent=31 // pred_region
          %p574 = scmp.lt.s32.totalorder %s26, 1
          %s575 = scalar_select %p574, %s26, 1
          %s576 = scalar_lea.vmem %s11, %s575
        $region64: #{tpu_custom_call.1} parent=31 // pred_fallthru
          _
        // Predicated region
        $region65: #{tpu_custom_call.1} parent=31 // pred_check
          %p577 = pneg %p338
        $region66: #{tpu_custom_call.1} parent=31 // pred_check_branch
          %579 = sbr.rel (%p577) target = $region68
        $region67: #{tpu_custom_call.1} parent=31 // pred_region
          %p580 = scmp.lt.s32.totalorder %s26, 1
          %s581 = scalar_select %p580, %s26, 1
          %s582 = smul.addr %s581, 8
          %s583 = smul.addr %s582, 8
          %s584 = scalar_lea.vmem %s12, %s583
        $region68: #{tpu_custom_call.1} parent=31 // pred_fallthru
          _
        // Predicated region
        $region69: #{tpu_custom_call.1} parent=31 // pred_check
          %p585 = pneg %p364
        $region70: #{tpu_custom_call.1} parent=31 // pred_check_branch
          %587 = sbr.rel (%p585) target = $region72
        $region71: #{tpu_custom_call.1} parent=31 // pred_region
          %p588 = scmp.lt.s32.totalorder %s26, 1
          %s589 = scalar_select %p588, %s26, 1
          %s590 = scalar_lea.vmem %s13, %s589
        $region72: #{tpu_custom_call.1} parent=31 // pred_fallthru
          _
        // Predicated region
        $region73: #{tpu_custom_call.1} parent=31 // pred_check
          %p591 = pneg %p390
        $region74: #{tpu_custom_call.1} parent=31 // pred_check_branch
          %593 = sbr.rel (%p591) target = $region76
        $region75: #{tpu_custom_call.1} parent=31 // pred_region
          %s594 = sand.u32 %s26, 1
          %s595 = scalar_lea.sflag [#allocation3], %s594
          %s596 = sand.u32 %s380, 1
          %s597 = scalar_lea.vmem [#allocation11], %s596
          %599 = vsyncadd %s595, 0
          %s600 = scalar_lea.hbm %s14, %s26
          %s602 = sshll.u32 %s600, 4
          %s603 = int_to_ptr.hbm [resolvable:$true] %s602
          %s604 = sshll.u32 %s597, 4
          %s605 = int_to_ptr.vmem [resolvable:$true] %s604
          %607 = dma.hbm_to_vmem [thread:$0]  %s603, 16, %s605, %s595
        $region76: #{tpu_custom_call.1} parent=31 // pred_fallthru
          _
        // Predicated region
        $region77: #{tpu_custom_call.1} parent=31 // pred_check
          %p608 = pneg %p416
        $region78: #{tpu_custom_call.1} parent=31 // pred_check_branch
          %610 = sbr.rel (%p608) target = $region80
        $region79: #{tpu_custom_call.1} parent=31 // pred_region
          %p611 = scmp.lt.s32.totalorder %s26, 1
          %s612 = scalar_select %p611, %s26, 1
          %s613 = scalar_lea.vmem %s15, %s612
        $region80: #{tpu_custom_call.1} parent=31 // pred_fallthru
          _
      $region32: #{tpu_custom_call.1} parent=5 // pred_fallthru
        _
      %p614 = scmp.le.s32.totalorder 1, %s26
      %p615 = scmp.lt.s32.totalorder %s26, 3
      %p616 = pnand %p614, %p615
      %p617 = pneg %p616
      // Predicated region
      $region81: #{tpu_custom_call.1} parent=5 // pred_check
        _
      $region82: #{tpu_custom_call.1} parent=5 // pred_check_branch
        %619 = sbr.rel (%p616) target = $region84
      $region83: #{tpu_custom_call.1} parent=5 // pred_region
        %s620 = ssub.s32 %s26, 1
        // Predicated region
        $region85: #{tpu_custom_call.1} parent=83 // pred_check
          %p621 = pneg %p47
        $region86: #{tpu_custom_call.1} parent=83 // pred_check_branch
          %623 = sbr.rel (%p621) target = $region88
        $region87: #{tpu_custom_call.1} parent=83 // pred_region
          %625 = dma.done [#allocation3], 256
        $region88: #{tpu_custom_call.1} parent=83 // pred_fallthru
          _
        // Predicated region
        $region89: #{tpu_custom_call.1} parent=83 // pred_check
          %p626 = pneg %p68
        $region90: #{tpu_custom_call.1} parent=83 // pred_check_branch
          %628 = sbr.rel (%p626) target = $region92
        $region91: #{tpu_custom_call.1} parent=83 // pred_region
          %630 = dma.done [#allocation6], 32
        $region92: #{tpu_custom_call.1} parent=83 // pred_fallthru
          _
        // Predicated region
        $region93: #{tpu_custom_call.1} parent=83 // pred_check
          %p631 = pneg %p89
        $region94: #{tpu_custom_call.1} parent=83 // pred_check_branch
          %633 = sbr.rel (%p631) target = $region96
        $region95: #{tpu_custom_call.1} parent=83 // pred_region
          %635 = dma.done [#allocation6], 16
        $region96: #{tpu_custom_call.1} parent=83 // pred_fallthru
          _
        // Predicated region
        $region97: #{tpu_custom_call.1} parent=83 // pred_check
          %p636 = pneg %p110
        $region98: #{tpu_custom_call.1} parent=83 // pred_check_branch
          %638 = sbr.rel (%p636) target = $region100
        $region99: #{tpu_custom_call.1} parent=83 // pred_region
          %640 = dma.done [#allocation9], 16
        $region100: #{tpu_custom_call.1} parent=83 // pred_fallthru
          _
        %s641 = sand.u32 %s31, 1
        %s642 = scalar_lea.sflag [#allocation3], %s641
        %s643 = sand.u32 %s227, 1
        %s644 = scalar_lea.vmem [#allocation10], %s643
        // Predicated region
        $region101: #{tpu_custom_call.1} parent=83 // pred_check
          %p645 = pneg %p240
        $region102: #{tpu_custom_call.1} parent=83 // pred_check_branch
          %647 = sbr.rel (%p645) target = $region104
        $region103: #{tpu_custom_call.1} parent=83 // pred_region
          %649 = dma.done %s642, 16
        $region104: #{tpu_custom_call.1} parent=83 // pred_fallthru
          _
        %s650 = sand.u32 %s31, 1
        %s651 = scalar_lea.sflag [#allocation3], %s650
        %s652 = sand.u32 %s383, 1
        %s653 = scalar_lea.vmem [#allocation11], %s652
        // Predicated region
        $region105: #{tpu_custom_call.1} parent=83 // pred_check
          %p654 = pneg %p396
        $region106: #{tpu_custom_call.1} parent=83 // pred_check_branch
          %656 = sbr.rel (%p654) target = $region108
        $region107: #{tpu_custom_call.1} parent=83 // pred_region
          %658 = dma.done %s651, 16
        $region108: #{tpu_custom_call.1} parent=83 // pred_fallthru
          _
        %p659 = pneg %p47
        %p660 = pneg %p44
        %p661 = pneg %p68
        %p662 = pneg %p65
        %p663 = pneg %p89
        %p664 = pneg %p86
        %p665 = pneg %p110
        %p666 = pneg %p107
        %p667 = scmp.lt.s32.totalorder %s31, 1
        %s668 = scalar_select %p667, %s31, 1
        %s669 = smul.addr %s668, 4
        %s670 = smul.addr %s669, 8
        %s671 = scalar_lea.vmem %s4, %s670
        %p672 = pneg %p136
        %p673 = pneg %p133
        %p674 = scmp.lt.s32.totalorder %s31, 1
        %s675 = scalar_select %p674, %s31, 1
        %s676 = scalar_lea.vmem %s5, %s675
        %p677 = pneg %p162
        %p678 = pneg %p159
        %p679 = scmp.lt.s32.totalorder %s31, 1
        %s680 = scalar_select %p679, %s31, 1
        %s681 = smul.addr %s680, 4
        %s682 = smul.addr %s681, 8
        %s683 = scalar_lea.vmem %s6, %s682
        %p684 = pneg %p188
        %p685 = pneg %p185
        %p686 = scmp.lt.s32.totalorder %s31, 1
        %s687 = scalar_select %p686, %s31, 1
        %s688 = scalar_lea.vmem %s7, %s687
        %p689 = pneg %p214
        %p690 = pneg %p211
        %s691 = sand.u32 %s31, 1
        %s692 = scalar_lea.sflag [#allocation3], %s691
        %s693 = sand.u32 %s227, 1
        %s694 = scalar_lea.vmem [#allocation10], %s693
        %p695 = pneg %p240
        %p696 = pneg %p237
        %p697 = scmp.lt.s32.totalorder %s31, 1
        %s698 = scalar_select %p697, %s31, 1
        %s699 = scalar_lea.vmem %s9, %s698
        %p700 = pneg %p266
        %p701 = pneg %p263
        %p702 = scmp.lt.s32.totalorder %s31, 1
        %s703 = scalar_select %p702, %s31, 1
        %s704 = smul.addr %s703, 4
        %s705 = smul.addr %s704, 8
        %s706 = scalar_lea.vmem %s10, %s705
        %p707 = pneg %p292
        %p708 = pneg %p289
        %p709 = scmp.lt.s32.totalorder %s31, 1
        %s710 = scalar_select %p709, %s31, 1
        %s711 = scalar_lea.vmem %s11, %s710
        %p712 = pneg %p318
        %p713 = pneg %p315
        %p714 = scmp.lt.s32.totalorder %s31, 1
        %s715 = scalar_select %p714, %s31, 1
        %s716 = smul.addr %s715, 8
        %s717 = smul.addr %s716, 8
        %s718 = scalar_lea.vmem %s12, %s717
        %p719 = pneg %p344
        %p720 = pneg %p341
        %p721 = scmp.lt.s32.totalorder %s31, 1
        %s722 = scalar_select %p721, %s31, 1
        %s723 = scalar_lea.vmem %s13, %s722
        %p724 = pneg %p370
        %p725 = pneg %p367
        %s726 = sand.u32 %s31, 1
        %s727 = scalar_lea.sflag [#allocation3], %s726
        %s728 = sand.u32 %s383, 1
        %s729 = scalar_lea.vmem [#allocation11], %s728
        %p730 = pneg %p396
        %p731 = pneg %p393
        %p732 = scmp.lt.s32.totalorder %s31, 1
        %s733 = scalar_select %p732, %s31, 1
        %s734 = scalar_lea.vmem %s15, %s733
        %p735 = pneg %p422
        %p736 = pneg %p419
        %p737 = pneg %p443
        %p738 = pneg %p440
        %p739 = scmp.lt.s32.totalorder %s31, 1
        %s740 = scalar_select %p739, %s31, 1
        %s741 = smul.addr %s740, 4
        %s742 = smul.addr %s741, 8
        %s743 = scalar_lea.vmem %s4, %s742
        %p744 = scmp.lt.s32.totalorder %s31, 1
        %s745 = scalar_select %p744, %s31, 1
        %s746 = scalar_lea.vmem %s5, %s745
        %p747 = scmp.lt.s32.totalorder %s31, 1
        %s748 = scalar_select %p747, %s31, 1
        %s749 = smul.addr %s748, 4
        %s750 = smul.addr %s749, 8
        %s751 = scalar_lea.vmem %s6, %s750
        %p752 = scmp.lt.s32.totalorder %s31, 1
        %s753 = scalar_select %p752, %s31, 1
        %s754 = scalar_lea.vmem %s7, %s753
        %p755 = scmp.lt.s32.totalorder %s31, 1
        %s756 = scalar_select %p755, %s31, 1
        %s757 = scalar_lea.vmem %s9, %s756
        %p758 = scmp.lt.s32.totalorder %s31, 1
        %s759 = scalar_select %p758, %s31, 1
        %s760 = smul.addr %s759, 4
        %s761 = smul.addr %s760, 8
        %s762 = scalar_lea.vmem %s10, %s761
        %p763 = scmp.lt.s32.totalorder %s31, 1
        %s764 = scalar_select %p763, %s31, 1
        %s765 = scalar_lea.vmem %s11, %s764
        %p766 = scmp.lt.s32.totalorder %s31, 1
        %s767 = scalar_select %p766, %s31, 1
        %s768 = smul.addr %s767, 8
        %s769 = smul.addr %s768, 8
        %s770 = scalar_lea.vmem %s12, %s769
        %p771 = scmp.lt.s32.totalorder %s31, 1
        %s772 = scalar_select %p771, %s31, 1
        %s773 = scalar_lea.vmem %s13, %s772
        %p774 = scmp.lt.s32.totalorder %s31, 1
        %s775 = scalar_select %p774, %s31, 1
        %s776 = scalar_lea.vmem %s15, %s775
        %p777 = scmp.eq.s32.totalorder %s31, 0
        // Predicated region
        $region109: #{tpu_custom_call.1} parent=83 // pred_check
          %p778 = pneg %p777
        $region110: #{tpu_custom_call.1} parent=83 // pred_check_branch
          %780 = sbr.rel (%p778) target = $region112
        $region111: #{tpu_custom_call.1} parent=83 // pred_region
          %v781 = vld [vmem:[#allocation2] sm:$0xff]
          %v782 = vld [vmem:[#allocation2 + $0x8] sm:$0xff]
          %v783 = vld [vmem:[#allocation7] sm:$0x1]
          %v784 = vld [vmem:[#allocation8] sm:$0x1]
          %vm785 = vcmask 261120
          %v786 = vsel %vm785, %v781, 0.0
          %787 = vadd.xlane.f32.xlu0 %v786
          %v788 = vpop.xlane.xlu0 %787
          %v789 = vsel %vm785, %v782, 0.0
          %790 = vadd.xlane.f32.xlu0 %v789
          %v791 = vpop.xlane.xlu0 %790
          %v792 = vrcp.pop 32.0
          %v793 = vmul.f32 32.0, %v792
          %v794 = vsub.f32 1.0, %v793
          %v795 = vmul.f32 %v792, %v794
          %v796 = vadd.f32 %v792, %v795
          %vm797 = vweird.f32 %v792
          %v798 = vsel %vm797, %v792, %v796
          %v799 = vmul.f32 %v788, %v798
          %v800 = vmul.f32 %v791, %v798
          %v801 = vsub.f32 %v781, %v799
          %v802 = vsub.f32 %v782, %v800
          %v803 = vmul.f32 %v801, %v801
          %v804 = vmul.f32 %v802, %v802
          %v805 = vsel %vm785, %v803, 0.0
          %806 = vadd.xlane.f32.xlu0 %v805
          %v807 = vpop.xlane.xlu0 %806
          %v808 = vsel %vm785, %v804, 0.0
          %809 = vadd.xlane.f32.xlu0 %v808
          %v810 = vpop.xlane.xlu0 %809
          %v811 = vmul.f32 %v807, %v798
          %v812 = vmul.f32 %v810, %v798
          %v813 = vadd.f32 %v811, 1e-12
          %v814 = vadd.f32 %v812, 1e-12
          %v815 = vrsqrt.pop %v813
          %v816 = vmul.f32 %v815, %v813
          %v817 = vmul.f32 %v816, %v815
          %v818 = vmul.f32 0.5, %v817
          %v819 = vsub.f32 1.5, %v818
          %v820 = vmul.f32 %v815, %v819
          %vm821 = vweird.f32 %v813
          %vm822 = vweird.f32 %v815
          %vm823 = vmor %vm821, %vm822
          %v824 = vsel %vm823, %v815, %v820
          %v825 = vrsqrt.pop %v814
          %v826 = vmul.f32 %v825, %v814
          %v827 = vmul.f32 %v826, %v825
          %v828 = vmul.f32 0.5, %v827
          %v829 = vsub.f32 1.5, %v828
          %v830 = vmul.f32 %v825, %v829
          %vm831 = vweird.f32 %v814
          %vm832 = vweird.f32 %v825
          %vm833 = vmor %vm831, %vm832
          %v834 = vsel %vm833, %v825, %v830
          %v835 = vmul.f32 %v801, %v824
          %v836 = vmul.f32 %v802, %v834
          %v838 = vperm.slane %v783, 0
          %v840 = vmul.f32 %v835, %v838
          %v841 = vmul.f32 %v836, %v838
          %v843 = vperm.slane %v784, 0
          %v845 = vadd.f32 %v840, %v843
          %v846 = vadd.f32 %v841, %v843
          %847 = vst.msk [vmem:[#allocation12] sm:$0xff] %vm785, %v845
          %848 = vst.msk [vmem:[#allocation12 + $0x8] sm:$0xff] %vm785, %v846
        $region112: #{tpu_custom_call.1} parent=83 // pred_fallthru
          _
        %v849 = vld [vmem:[#allocation12] sm:$0xff]
        %v850 = vld [vmem:[#allocation12 + $0x8] sm:$0xff]
        %v851 = vld [vmem:[#allocation5] sm:$0x3]
        %v852 = vld [vmem:[%s743] sm:$0xff]
        %v853 = vld [vmem:[%s743 + $0x8] sm:$0xff]
        %v854 = vld [vmem:[%s743 + $0x10] sm:$0xff]
        %v855 = vld [vmem:[%s743 + $0x18] sm:$0xff]
        %v856 = vld [vmem:[%s746] sm:$0x1]
        %v858 = vperm.slane %v856, 0
        %vm860 = vcmask 261120
        %v862 = vsel %vm860, %v849, 0
        %v865 = vsel %vm860, %v850, 0
        %867 = vmatpush.msra.mxu0 0.0
        %868 = vmatpush.msra.mxu0 0.0
        %869 = vmatpush.msra.mxu0 0.0
        %870 = vmatpush.msra.mxu0 0.0
        %871 = vmatpush.msra.mxu0 0.0
        %872 = vmatpush.msra.mxu0 0.0
        %873 = vmatpush.msra.mxu0 0.0
        %874 = vmatpush.msra.mxu0 0.0
        %875 = vmatpush.msra.mxu0 0.0
        %876 = vmatpush.msra.mxu0 0.0
        %877 = vmatpush.msra.mxu0 0.0
        %878 = vmatpush.msra.mxu0 0.0
        %879 = vmatpush.msra.mxu0 %v855
        %880 = vmatpush.msra.mxu0 %v854
        %881 = vmatpush.msra.mxu0 %v853
        %882 = vmatpush.msra.mxu0 %v852
        %883 = vmatmul.f32.gmra.mxu0 %v862
        %v884 = vpop.f32.mrf.mxu0
        %v885 = vadd.f32 %v858, %v884
        %886 = vmatmul.f32.gmra.mxu0 %v865
        %v887 = vpop.f32.mrf.mxu0
        %v888 = vadd.f32 %v858, %v887
        %889 = vdwg.mxu0
        %v891 = vrot.slane %v851, 1
        %v892 = vperm.slane %v851, 0
        %v893 = vperm.slane %v891, 0
        %897 = vrot.lane.b32.xlu0 %v885, 96
        %v898 = vpop.permute.xlu0 %897
        %vm899 = vcmask 130048
        %v900 = vsel %vm899, %v885, 0
        %v902 = vsel %vm899, %v898, 0
        %904 = vmatpush.xpose.msra.mxu0 0.0
        %905 = vmatpush.xpose.msra.mxu0 0.0
        %906 = vmatpush.xpose.msra.mxu0 0.0
        %907 = vmatpush.xpose.msra.mxu0 0.0
        %908 = vmatpush.xpose.msra.mxu0 0.0
        %909 = vmatpush.xpose.msra.mxu0 0.0
        %910 = vmatpush.xpose.msra.mxu0 0.0
        %911 = vmatpush.xpose.msra.mxu0 0.0
        %912 = vmatpush.xpose.msra.mxu0 0.0
        %913 = vmatpush.xpose.msra.mxu0 0.0
        %914 = vmatpush.xpose.msra.mxu0 0.0
        %915 = vmatpush.xpose.msra.mxu0 0.0
        %916 = vmatpush.xpose.msra.mxu0 0.0
        %917 = vmatpush.xpose.msra.mxu0 0.0
        %918 = vmatpush.xpose.msra.mxu0 0.0
        %919 = vmatpush.xpose.msra.mxu0 %v902
        %920 = vmatmul.f32.gmra.mxu0 %v900
        %v921 = vpop.f32.mrf.mxu0
        %v922 = vadd.f32 %v892, %v921
        %923 = vdwg.mxu0
        %925 = vrot.lane.b32.xlu0 %v888, 96
        %v926 = vpop.permute.xlu0 %925
        %v927 = vsel %vm899, %v888, 0
        %v929 = vsel %vm899, %v926, 0
        %931 = vmatpush.xpose.msra.mxu0 0.0
        %932 = vmatpush.xpose.msra.mxu0 0.0
        %933 = vmatpush.xpose.msra.mxu0 0.0
        %934 = vmatpush.xpose.msra.mxu0 0.0
        %935 = vmatpush.xpose.msra.mxu0 0.0
        %936 = vmatpush.xpose.msra.mxu0 0.0
        %937 = vmatpush.xpose.msra.mxu0 0.0
        %938 = vmatpush.xpose.msra.mxu0 0.0
        %939 = vmatpush.xpose.msra.mxu0 0.0
        %940 = vmatpush.xpose.msra.mxu0 0.0
        %941 = vmatpush.xpose.msra.mxu0 0.0
        %942 = vmatpush.xpose.msra.mxu0 0.0
        %943 = vmatpush.xpose.msra.mxu0 0.0
        %944 = vmatpush.xpose.msra.mxu0 0.0
        %945 = vmatpush.xpose.msra.mxu0 0.0
        %946 = vmatpush.xpose.msra.mxu0 %v929
        %947 = vmatmul.f32.gmra.mxu0 %v927
        %v948 = vpop.f32.mrf.mxu0
        %v949 = vadd.f32 %v893, %v948
        %950 = vdwg.mxu0
        %vm951 = vcmask 64512
        %v952 = vsel %vm951, %v922, -inf
        %953 = vmax.xlane.f32.xlu0 %v952
        %v954 = vpop.xlane.xlu0 %953
        %v955 = vsel %vm951, %v949, -inf
        %956 = vmax.xlane.f32.xlu0 %v955
        %v957 = vpop.xlane.xlu0 %956
        %v958 = vsub.f32 %v922, %v954
        %v959 = vsub.f32 %v949, %v957
        %v960 = vmul.f32 %v958, 1.442695
        %v961 = vpow.pop %v960
        %v962 = vmul.f32 %v959, 1.442695
        %v963 = vpow.pop %v962
        %v964 = vsel %vm951, %v961, 0.0
        %965 = vadd.xlane.f32.xlu0 %v964
        %v966 = vpop.xlane.xlu0 %965
        %v967 = vsel %vm951, %v963, 0.0
        %968 = vadd.xlane.f32.xlu0 %v967
        %v969 = vpop.xlane.xlu0 %968
        %v970 = vrcp.pop %v966
        %v971 = vrcp.pop %v969
        %v972 = vmul.f32 %v961, %v970
        %v973 = vmul.f32 %v963, %v971
        %974 = vrot.lane.b32.xlu0 %v885, 64
        %v975 = vpop.permute.xlu0 %974
        %v978 = vsel %vm951, %v972, 0
        %980 = vmatpush.msra.mxu0 0.0
        %981 = vmatpush.msra.mxu0 0.0
        %982 = vmatpush.msra.mxu0 0.0
        %983 = vmatpush.msra.mxu0 0.0
        %984 = vmatpush.msra.mxu0 0.0
        %985 = vmatpush.msra.mxu0 0.0
        %986 = vmatpush.msra.mxu0 0.0
        %987 = vmatpush.msra.mxu0 0.0
        %988 = vmatpush.msra.mxu0 0.0
        %989 = vmatpush.msra.mxu0 0.0
        %990 = vmatpush.msra.mxu0 0.0
        %991 = vmatpush.msra.mxu0 0.0
        %992 = vmatpush.msra.mxu0 0.0
        %993 = vmatpush.msra.mxu0 0.0
        %994 = vmatpush.msra.mxu0 0.0
        %995 = vmatpush.msra.mxu0 %v975
        %996 = vmatmul.f32.gmra.mxu0 %v978
        %v997 = vpop.f32.mrf.mxu0
        %v998 = vadd.f32 0.0, %v997
        %999 = vdwg.mxu0
        %1000 = vrot.lane.b32.xlu0 %v888, 64
        %v1001 = vpop.permute.xlu0 %1000
        %v1004 = vsel %vm951, %v973, 0
        %1006 = vmatpush.msra.mxu0 0.0
        %1007 = vmatpush.msra.mxu0 0.0
        %1008 = vmatpush.msra.mxu0 0.0
        %1009 = vmatpush.msra.mxu0 0.0
        %1010 = vmatpush.msra.mxu0 0.0
        %1011 = vmatpush.msra.mxu0 0.0
        %1012 = vmatpush.msra.mxu0 0.0
        %1013 = vmatpush.msra.mxu0 0.0
        %1014 = vmatpush.msra.mxu0 0.0
        %1015 = vmatpush.msra.mxu0 0.0
        %1016 = vmatpush.msra.mxu0 0.0
        %1017 = vmatpush.msra.mxu0 0.0
        %1018 = vmatpush.msra.mxu0 0.0
        %1019 = vmatpush.msra.mxu0 0.0
        %1020 = vmatpush.msra.mxu0 0.0
        %1021 = vmatpush.msra.mxu0 %v1001
        %1022 = vmatmul.f32.gmra.mxu0 %v1004
        %v1023 = vpop.f32.mrf.mxu0
        %v1024 = vadd.f32 0.0, %v1023
        %1025 = vdwg.mxu0
        %1026 = vrot.lane.b32.xlu0 %v885, 112
        %v1027 = vpop.permute.xlu0 %1026
        %1028 = vrot.lane.b32.xlu0 %v885, 80
        %v1029 = vpop.permute.xlu0 %1028
        %v1030 = vsel %vm899, %v1027, 0
        %v1032 = vsel %vm899, %v1029, 0
        %1034 = vmatpush.xpose.msra.mxu0 0.0
        %1035 = vmatpush.xpose.msra.mxu0 0.0
        %1036 = vmatpush.xpose.msra.mxu0 0.0
        %1037 = vmatpush.xpose.msra.mxu0 0.0
        %1038 = vmatpush.xpose.msra.mxu0 0.0
        %1039 = vmatpush.xpose.msra.mxu0 0.0
        %1040 = vmatpush.xpose.msra.mxu0 0.0
        %1041 = vmatpush.xpose.msra.mxu0 0.0
        %1042 = vmatpush.xpose.msra.mxu0 0.0
        %1043 = vmatpush.xpose.msra.mxu0 0.0
        %1044 = vmatpush.xpose.msra.mxu0 0.0
        %1045 = vmatpush.xpose.msra.mxu0 0.0
        %1046 = vmatpush.xpose.msra.mxu0 0.0
        %1047 = vmatpush.xpose.msra.mxu0 0.0
        %1048 = vmatpush.xpose.msra.mxu0 0.0
        %1049 = vmatpush.xpose.msra.mxu0 %v1032
        %1050 = vmatmul.f32.gmra.mxu0 %v1030
        %v1051 = vpop.f32.mrf.mxu0
        %v1052 = vadd.f32 %v892, %v1051
        %1053 = vdwg.mxu0
        %1054 = vrot.lane.b32.xlu0 %v888, 112
        %v1055 = vpop.permute.xlu0 %1054
        %1056 = vrot.lane.b32.xlu0 %v888, 80
        %v1057 = vpop.permute.xlu0 %1056
        %v1058 = vsel %vm899, %v1055, 0
        %v1060 = vsel %vm899, %v1057, 0
        %1062 = vmatpush.xpose.msra.mxu0 0.0
        %1063 = vmatpush.xpose.msra.mxu0 0.0
        %1064 = vmatpush.xpose.msra.mxu0 0.0
        %1065 = vmatpush.xpose.msra.mxu0 0.0
        %1066 = vmatpush.xpose.msra.mxu0 0.0
        %1067 = vmatpush.xpose.msra.mxu0 0.0
        %1068 = vmatpush.xpose.msra.mxu0 0.0
        %1069 = vmatpush.xpose.msra.mxu0 0.0
        %1070 = vmatpush.xpose.msra.mxu0 0.0
        %1071 = vmatpush.xpose.msra.mxu0 0.0
        %1072 = vmatpush.xpose.msra.mxu0 0.0
        %1073 = vmatpush.xpose.msra.mxu0 0.0
        %1074 = vmatpush.xpose.msra.mxu0 0.0
        %1075 = vmatpush.xpose.msra.mxu0 0.0
        %1076 = vmatpush.xpose.msra.mxu0 0.0
        %1077 = vmatpush.xpose.msra.mxu0 %v1060
        %1078 = vmatmul.f32.gmra.mxu0 %v1058
        %v1079 = vpop.f32.mrf.mxu0
        %v1080 = vadd.f32 %v893, %v1079
        %1081 = vdwg.mxu0
        %v1082 = vsel %vm951, %v1052, -inf
        %1083 = vmax.xlane.f32.xlu0 %v1082
        %v1084 = vpop.xlane.xlu0 %1083
        %v1085 = vsel %vm951, %v1080, -inf
        %1086 = vmax.xlane.f32.xlu0 %v1085
        %v1087 = vpop.xlane.xlu0 %1086
        %v1088 = vsub.f32 %v1052, %v1084
        %v1089 = vsub.f32 %v1080, %v1087
        %v1090 = vmul.f32 %v1088, 1.442695
        %v1091 = vpow.pop %v1090
        %v1092 = vmul.f32 %v1089, 1.442695
        %v1093 = vpow.pop %v1092
        %v1094 = vsel %vm951, %v1091, 0.0
        %1095 = vadd.xlane.f32.xlu0 %v1094
        %v1096 = vpop.xlane.xlu0 %1095
        %v1097 = vsel %vm951, %v1093, 0.0
        %1098 = vadd.xlane.f32.xlu0 %v1097
        %v1099 = vpop.xlane.xlu0 %1098
        %v1100 = vrcp.pop %v1096
        %v1101 = vrcp.pop %v1099
        %v1102 = vmul.f32 %v1091, %v1100
        %v1103 = vmul.f32 %v1093, %v1101
        %1104 = vrot.lane.b32.xlu0 %v885, 48
        %v1105 = vpop.permute.xlu0 %1104
        %v1108 = vsel %vm951, %v1102, 0
        %1110 = vmatpush.msra.mxu0 0.0
        %1111 = vmatpush.msra.mxu0 0.0
        %1112 = vmatpush.msra.mxu0 0.0
        %1113 = vmatpush.msra.mxu0 0.0
        %1114 = vmatpush.msra.mxu0 0.0
        %1115 = vmatpush.msra.mxu0 0.0
        %1116 = vmatpush.msra.mxu0 0.0
        %1117 = vmatpush.msra.mxu0 0.0
        %1118 = vmatpush.msra.mxu0 0.0
        %1119 = vmatpush.msra.mxu0 0.0
        %1120 = vmatpush.msra.mxu0 0.0
        %1121 = vmatpush.msra.mxu0 0.0
        %1122 = vmatpush.msra.mxu0 0.0
        %1123 = vmatpush.msra.mxu0 0.0
        %1124 = vmatpush.msra.mxu0 0.0
        %1125 = vmatpush.msra.mxu0 %v1105
        %1126 = vmatmul.f32.gmra.mxu0 %v1108
        %v1127 = vpop.f32.mrf.mxu0
        %v1128 = vadd.f32 0.0, %v1127
        %1129 = vdwg.mxu0
        %1130 = vrot.lane.b32.xlu0 %v888, 48
        %v1131 = vpop.permute.xlu0 %1130
        %v1134 = vsel %vm951, %v1103, 0
        %1136 = vmatpush.msra.mxu0 0.0
        %1137 = vmatpush.msra.mxu0 0.0
        %1138 = vmatpush.msra.mxu0 0.0
        %1139 = vmatpush.msra.mxu0 0.0
        %1140 = vmatpush.msra.mxu0 0.0
        %1141 = vmatpush.msra.mxu0 0.0
        %1142 = vmatpush.msra.mxu0 0.0
        %1143 = vmatpush.msra.mxu0 0.0
        %1144 = vmatpush.msra.mxu0 0.0
        %1145 = vmatpush.msra.mxu0 0.0
        %1146 = vmatpush.msra.mxu0 0.0
        %1147 = vmatpush.msra.mxu0 0.0
        %1148 = vmatpush.msra.mxu0 0.0
        %1149 = vmatpush.msra.mxu0 0.0
        %1150 = vmatpush.msra.mxu0 0.0
        %1151 = vmatpush.msra.mxu0 %v1131
        %1152 = vmatmul.f32.gmra.mxu0 %v1134
        %v1153 = vpop.f32.mrf.mxu0
        %v1154 = vadd.f32 0.0, %v1153
        %1155 = vdwg.mxu0
        %1158 = vrot.lane.b32.xlu0 %v1128, 16
        %v1159 = vpop.permute.xlu0 %1158
        %1160 = vrot.lane.b32.xlu0 %v1154, 16
        %v1161 = vpop.permute.xlu0 %1160
        %v1164 = vsel %vm899, %v998, %v1159
        %v1165 = vsel %vm899, %v1024, %v1161
        %v1166 = vld [vmem:[%s751] sm:$0xff]
        %v1167 = vld [vmem:[%s751 + $0x8] sm:$0xff]
        %v1168 = vld [vmem:[%s751 + $0x10] sm:$0xff]
        %v1169 = vld [vmem:[%s751 + $0x18] sm:$0xff]
        %v1170 = vld [vmem:[%s754] sm:$0x1]
        %v1172 = vperm.slane %v1170, 0
        %v1175 = vsel %vm860, %v1164, 0
        %v1178 = vsel %vm860, %v1165, 0
        %1180 = vmatpush.msra.mxu0 0.0
        %1181 = vmatpush.msra.mxu0 0.0
        %1182 = vmatpush.msra.mxu0 0.0
        %1183 = vmatpush.msra.mxu0 0.0
        %1184 = vmatpush.msra.mxu0 0.0
        %1185 = vmatpush.msra.mxu0 0.0
        %1186 = vmatpush.msra.mxu0 0.0
        %1187 = vmatpush.msra.mxu0 0.0
        %1188 = vmatpush.msra.mxu0 0.0
        %1189 = vmatpush.msra.mxu0 0.0
        %1190 = vmatpush.msra.mxu0 0.0
        %1191 = vmatpush.msra.mxu0 0.0
        %1192 = vmatpush.msra.mxu0 %v1169
        %1193 = vmatpush.msra.mxu0 %v1168
        %1194 = vmatpush.msra.mxu0 %v1167
        %1195 = vmatpush.msra.mxu0 %v1166
        %1196 = vmatmul.f32.gmra.mxu0 %v1175
        %v1197 = vpop.f32.mrf.mxu0
        %v1198 = vadd.f32 %v1172, %v1197
        %1199 = vmatmul.f32.gmra.mxu0 %v1178
        %v1200 = vpop.f32.mrf.mxu0
        %v1201 = vadd.f32 %v1172, %v1200
        %1202 = vdwg.mxu0
        %v1203 = vadd.f32 %v849, %v1198
        %v1204 = vadd.f32 %v850, %v1201
        %v1205 = vld [vmem:[%s644] sm:$0x1]
        %v1206 = vld [vmem:[%s757] sm:$0x1]
        %v1207 = vsel %vm860, %v1203, 0.0
        %1208 = vadd.xlane.f32.xlu0 %v1207
        %v1209 = vpop.xlane.xlu0 %1208
        %v1210 = vsel %vm860, %v1204, 0.0
        %1211 = vadd.xlane.f32.xlu0 %v1210
        %v1212 = vpop.xlane.xlu0 %1211
        %v1213 = vrcp.pop 32.0
        %v1214 = vmul.f32 32.0, %v1213
        %v1215 = vsub.f32 1.0, %v1214
        %v1216 = vmul.f32 %v1213, %v1215
        %v1217 = vadd.f32 %v1213, %v1216
        %vm1218 = vweird.f32 %v1213
        %v1219 = vsel %vm1218, %v1213, %v1217
        %v1220 = vmul.f32 %v1209, %v1219
        %v1221 = vmul.f32 %v1212, %v1219
        %v1222 = vsub.f32 %v1203, %v1220
        %v1223 = vsub.f32 %v1204, %v1221
        %v1224 = vmul.f32 %v1222, %v1222
        %v1225 = vmul.f32 %v1223, %v1223
        %v1226 = vsel %vm860, %v1224, 0.0
        %1227 = vadd.xlane.f32.xlu0 %v1226
        %v1228 = vpop.xlane.xlu0 %1227
        %v1229 = vsel %vm860, %v1225, 0.0
        %1230 = vadd.xlane.f32.xlu0 %v1229
        %v1231 = vpop.xlane.xlu0 %1230
        %v1232 = vmul.f32 %v1228, %v1219
        %v1233 = vmul.f32 %v1231, %v1219
        %v1234 = vadd.f32 %v1232, 1e-12
        %v1235 = vadd.f32 %v1233, 1e-12
        %v1236 = vrsqrt.pop %v1234
        %v1237 = vmul.f32 %v1236, %v1234
        %v1238 = vmul.f32 %v1237, %v1236
        %v1239 = vmul.f32 0.5, %v1238
        %v1240 = vsub.f32 1.5, %v1239
        %v1241 = vmul.f32 %v1236, %v1240
        %vm1242 = vweird.f32 %v1234
        %vm1243 = vweird.f32 %v1236
        %vm1244 = vmor %vm1242, %vm1243
        %v1245 = vsel %vm1244, %v1236, %v1241
        %v1246 = vrsqrt.pop %v1235
        %v1247 = vmul.f32 %v1246, %v1235
        %v1248 = vmul.f32 %v1247, %v1246
        %v1249 = vmul.f32 0.5, %v1248
        %v1250 = vsub.f32 1.5, %v1249
        %v1251 = vmul.f32 %v1246, %v1250
        %vm1252 = vweird.f32 %v1235
        %vm1253 = vweird.f32 %v1246
        %vm1254 = vmor %vm1252, %vm1253
        %v1255 = vsel %vm1254, %v1246, %v1251
        %v1256 = vmul.f32 %v1222, %v1245
        %v1257 = vmul.f32 %v1223, %v1255
        %v1259 = vperm.slane %v1205, 0
        %v1261 = vmul.f32 %v1256, %v1259
        %v1262 = vmul.f32 %v1257, %v1259
        %v1264 = vperm.slane %v1206, 0
        %v1266 = vadd.f32 %v1261, %v1264
        %v1267 = vadd.f32 %v1262, %v1264
        %v1268 = vld [vmem:[%s762] sm:$0xff]
        %v1269 = vld [vmem:[%s762 + $0x8] sm:$0xff]
        %v1270 = vld [vmem:[%s762 + $0x10] sm:$0xff]
        %v1271 = vld [vmem:[%s762 + $0x18] sm:$0xff]
        %v1272 = vld [vmem:[%s765] sm:$0x1]
        %v1274 = vperm.slane %v1272, 0
        %v1277 = vsel %vm860, %v1266, 0
        %v1280 = vsel %vm860, %v1267, 0
        %1282 = vmatpush.msra.mxu0 0.0
        %1283 = vmatpush.msra.mxu0 0.0
        %1284 = vmatpush.msra.mxu0 0.0
        %1285 = vmatpush.msra.mxu0 0.0
        %1286 = vmatpush.msra.mxu0 0.0
        %1287 = vmatpush.msra.mxu0 0.0
        %1288 = vmatpush.msra.mxu0 0.0
        %1289 = vmatpush.msra.mxu0 0.0
        %1290 = vmatpush.msra.mxu0 0.0
        %1291 = vmatpush.msra.mxu0 0.0
        %1292 = vmatpush.msra.mxu0 0.0
        %1293 = vmatpush.msra.mxu0 0.0
        %1294 = vmatpush.msra.mxu0 %v1271
        %1295 = vmatpush.msra.mxu0 %v1270
        %1296 = vmatpush.msra.mxu0 %v1269
        %1297 = vmatpush.msra.mxu0 %v1268
        %1298 = vmatmul.f32.gmra.mxu0 %v1277
        %v1299 = vpop.f32.mrf.mxu0
        %v1300 = vadd.f32 %v1274, %v1299
        %1301 = vmatmul.f32.gmra.mxu0 %v1280
        %v1302 = vpop.f32.mrf.mxu0
        %v1303 = vadd.f32 %v1274, %v1302
        %1304 = vdwg.mxu0
        %v1305 = vmul.f32 %v1300, %v1300
        %v1306 = vmul.f32 %v1303, %v1303
        %v1307 = vmul.f32 %v1300, %v1305
        %v1308 = vmul.f32 %v1303, %v1306
        %v1309 = vmul.f32 %v1307, 0.044715
        %v1310 = vmul.f32 %v1308, 0.044715
        %v1311 = vadd.f32 %v1300, %v1309
        %v1312 = vadd.f32 %v1303, %v1310
        %v1313 = vmul.f32 %v1311, 0.7978846
        %v1314 = vmul.f32 %v1312, 0.7978846
        %v1315 = vtanh.pop %v1313
        %v1316 = vtanh.pop %v1314
        %v1317 = vadd.f32 %v1315, 1.0
        %v1318 = vadd.f32 %v1316, 1.0
        %v1319 = vmul.f32 %v1317, 0.5
        %v1320 = vmul.f32 %v1318, 0.5
        %v1321 = vmul.f32 %v1300, %v1319
        %v1322 = vmul.f32 %v1303, %v1320
        %v1323 = vld [vmem:[%s770] sm:$0xff]
        %v1324 = vld [vmem:[%s770 + $0x8] sm:$0xff]
        %v1325 = vld [vmem:[%s770 + $0x10] sm:$0xff]
        %v1326 = vld [vmem:[%s770 + $0x18] sm:$0xff]
        %v1327 = vld [vmem:[%s770 + $0x20] sm:$0xff]
        %v1328 = vld [vmem:[%s770 + $0x28] sm:$0xff]
        %v1329 = vld [vmem:[%s770 + $0x30] sm:$0xff]
        %v1330 = vld [vmem:[%s770 + $0x38] sm:$0xff]
        %v1331 = vld [vmem:[%s773] sm:$0x1]
        %v1333 = vperm.slane %v1331, 0
        %vm1335 = vcmask 523264
        %v1337 = vsel %vm1335, %v1321, 0
        %v1340 = vsel %vm1335, %v1322, 0
        %1342 = vmatpush.msra.mxu0 0.0
        %1343 = vmatpush.msra.mxu0 0.0
        %1344 = vmatpush.msra.mxu0 0.0
        %1345 = vmatpush.msra.mxu0 0.0
        %1346 = vmatpush.msra.mxu0 0.0
        %1347 = vmatpush.msra.mxu0 0.0
        %1348 = vmatpush.msra.mxu0 0.0
        %1349 = vmatpush.msra.mxu0 0.0
        %1350 = vmatpush.msra.mxu0 %v1330
        %1351 = vmatpush.msra.mxu0 %v1329
        %1352 = vmatpush.msra.mxu0 %v1328
        %1353 = vmatpush.msra.mxu0 %v1327
        %1354 = vmatpush.msra.mxu0 %v1326
        %1355 = vmatpush.msra.mxu0 %v1325
        %1356 = vmatpush.msra.mxu0 %v1324
        %1357 = vmatpush.msra.mxu0 %v1323
        %1358 = vmatmul.f32.gmra.mxu0 %v1337
        %v1359 = vpop.f32.mrf.mxu0
        %v1360 = vadd.f32 %v1333, %v1359
        %1361 = vmatmul.f32.gmra.mxu0 %v1340
        %v1362 = vpop.f32.mrf.mxu0
        %v1363 = vadd.f32 %v1333, %v1362
        %1364 = vdwg.mxu0
        %v1365 = vadd.f32 %v1266, %v1360
        %v1366 = vadd.f32 %v1267, %v1363
        %v1367 = vld [vmem:[%s653] sm:$0x1]
        %v1368 = vld [vmem:[%s776] sm:$0x1]
        %v1369 = vsel %vm860, %v1365, 0.0
        %1370 = vadd.xlane.f32.xlu0 %v1369
        %v1371 = vpop.xlane.xlu0 %1370
        %v1372 = vsel %vm860, %v1366, 0.0
        %1373 = vadd.xlane.f32.xlu0 %v1372
        %v1374 = vpop.xlane.xlu0 %1373
        %v1375 = vmul.f32 %v1371, %v1219
        %v1376 = vmul.f32 %v1374, %v1219
        %v1377 = vsub.f32 %v1365, %v1375
        %v1378 = vsub.f32 %v1366, %v1376
        %v1379 = vmul.f32 %v1377, %v1377
        %v1380 = vmul.f32 %v1378, %v1378
        %v1381 = vsel %vm860, %v1379, 0.0
        %1382 = vadd.xlane.f32.xlu0 %v1381
        %v1383 = vpop.xlane.xlu0 %1382
        %v1384 = vsel %vm860, %v1380, 0.0
        %1385 = vadd.xlane.f32.xlu0 %v1384
        %v1386 = vpop.xlane.xlu0 %1385
        %v1387 = vmul.f32 %v1383, %v1219
        %v1388 = vmul.f32 %v1386, %v1219
        %v1389 = vadd.f32 %v1387, 1e-12
        %v1390 = vadd.f32 %v1388, 1e-12
        %v1391 = vrsqrt.pop %v1389
        %v1392 = vmul.f32 %v1391, %v1389
        %v1393 = vmul.f32 %v1392, %v1391
        %v1394 = vmul.f32 0.5, %v1393
        %v1395 = vsub.f32 1.5, %v1394
        %v1396 = vmul.f32 %v1391, %v1395
        %vm1397 = vweird.f32 %v1389
        %vm1398 = vweird.f32 %v1391
        %vm1399 = vmor %vm1397, %vm1398
        %v1400 = vsel %vm1399, %v1391, %v1396
        %v1401 = vrsqrt.pop %v1390
        %v1402 = vmul.f32 %v1401, %v1390
        %v1403 = vmul.f32 %v1402, %v1401
        %v1404 = vmul.f32 0.5, %v1403
        %v1405 = vsub.f32 1.5, %v1404
        %v1406 = vmul.f32 %v1401, %v1405
        %vm1407 = vweird.f32 %v1390
        %vm1408 = vweird.f32 %v1401
        %vm1409 = vmor %vm1407, %vm1408
        %v1410 = vsel %vm1409, %v1401, %v1406
        %v1411 = vmul.f32 %v1377, %v1400
        %v1412 = vmul.f32 %v1378, %v1410
        %v1414 = vperm.slane %v1367, 0
        %v1416 = vmul.f32 %v1411, %v1414
        %v1417 = vmul.f32 %v1412, %v1414
        %v1419 = vperm.slane %v1368, 0
        %v1421 = vadd.f32 %v1416, %v1419
        %v1422 = vadd.f32 %v1417, %v1419
        %1423 = vst.msk [vmem:[#allocation12] sm:$0xff] %vm860, %v1421
        %1424 = vst.msk [vmem:[#allocation12 + $0x8] sm:$0xff] %vm860, %v1422
        // Predicated region
        $region113: #{tpu_custom_call.1} parent=83 // pred_check
          %p1425 = pneg %p440
        $region114: #{tpu_custom_call.1} parent=83 // pred_check_branch
          %1427 = sbr.rel (%p1425) target = $region116
        $region115: #{tpu_custom_call.1} parent=83 // pred_region
          %1429 = vsyncadd [#allocation4], 0
          %s1430 = sshll.u32 [#allocation12], 4
          %s1431 = int_to_ptr.vmem [resolvable:$true] %s1430
          %s1432 = sshll.u32 %s16, 4
          %s1433 = int_to_ptr.hbm [resolvable:$true] %s1432
          %1438 = dma.vmem_to_hbm [thread:$0]  %s1431, 256, %s1433, [#allocation4], 128, 128, 8
        $region116: #{tpu_custom_call.1} parent=83 // pred_fallthru
          _
        // Predicated region
        $region117: #{tpu_custom_call.1} parent=83 // pred_check
          %p1439 = pneg %p440
        $region118: #{tpu_custom_call.1} parent=83 // pred_check_branch
          %1441 = sbr.rel (%p1439) target = $region120
        $region119: #{tpu_custom_call.1} parent=83 // pred_region
          %1443 = dma.done [#allocation4], 256
        $region120: #{tpu_custom_call.1} parent=83 // pred_fallthru
          _
      $region84: #{tpu_custom_call.1} parent=5 // pred_fallthru
        _
      %p1444 = scmp.le.s32.totalorder 2, %s26
      // Predicated region
      $region121: #{tpu_custom_call.1} parent=5 // pred_check
        %p1445 = pneg %p1444
      $region122: #{tpu_custom_call.1} parent=5 // pred_check_branch
        %1447 = sbr.rel (%p1445) target = $region124
      $region123: #{tpu_custom_call.1} parent=5 // pred_region
        %s1448 = ssub.s32 %s26, 2
      $region124: #{tpu_custom_call.1} parent=5 // pred_fallthru
        _
    $region6: #{tpu_custom_call.1} parent=1 // loop_footer
      %s30 = sadd.s32 1, %s26
    $region7: #{tpu_custom_call.1} parent=1 // loop_footer_branch
      %25 = sbr.rel target = $region3
    $region8: #{tpu_custom_call.1} parent=1 // loop_exit
      _
    %1449 = vsyncpa [#allocation3], 1
    %s1450 = scalar_lea.sflag [#allocation3], 1
    %1451 = vsyncpa %s1450, 1
    %1452 = vsyncpa [#allocation6], 1
    %1453 = vsyncpa [#allocation9], 1
    %1454 = vsyncpa [#allocation4], 1
    %s1455 = scalar_lea.sflag [#allocation4], 1
    %1456 = vsyncpa %s1455, 1

</llo_original>
